<compile_context>
chip_gen: v7x
topology: tpu7x:2x2x1
jax: 0.10.0
libtpu: 0.0.40
codegen_flags: <defaults>
</compile_context>

<pallas_src>
import functools
import math

import jax
import jax.numpy as jnp
from jax import lax
from jax.experimental import pallas as pl
from jax.experimental.pallas import tpu as pltpu

# Flip to True in production: routes the softmax / LayerNorm reciprocal to the
# EUP (approx vrcp, essentially free).  Kept False here so the demo's tight
# f32 comparison against the pure-JAX reference passes.
_APPROX_RECIP = False


# ----------------------------- in-kernel math ------------------------------ #
def _layer_norm(x, a, b, eps=1e-6):
    # Annotated-Transformer LayerNorm: a*(x-mean)/(std+eps)+b with torch's
    # default *unbiased* std (correction=1).
    mean = jnp.mean(x, axis=-1, keepdims=True)
    d = x - mean
    var = jnp.sum(d * d, axis=-1, keepdims=True) * (1.0 / (x.shape[-1] - 1))
    inv = pl.reciprocal(jnp.sqrt(var) + eps, approx=_APPROX_RECIP)
    return a * (d * inv) + b


def encoder_kernel(x_ref, bias_ref,
                   wqkv_ref, bqkv_ref, wo_ref, bo_ref,
                   ln1a_ref, ln1b_ref, ln2a_ref, ln2b_ref,
                   w1_ref, b1_ref, w2_ref, b2_ref,
                   fa_ref, fb_ref,
                   out_ref, att_ref,
                   xact_ref, ctx_ref,
                   *, num_heads, compute_dtype):
    layer = pl.program_id(1)
    is_last = layer == pl.num_programs(1) - 1
    cd = compute_dtype

    # Load the batch element's activation into the resident VMEM scratch once.
    @pl.when(layer == 0)
    def _():
        xact_ref[...] = x_ref[0]

    x = xact_ref[...]            # [S, D]  current activation
    bias = bias_ref[0]           # [S, S]  additive mask bias (0 / -1e9)
    S, D = x.shape
    dk = D // num_heads

    # ---- sublayer 1: pre-norm multi-head self-attention + residual ----
    y = _layer_norm(x, ln1a_ref[0], ln1b_ref[0])
    # Fused QKV projection: one big MXU op.  1/sqrt(dk) is already folded into
    # the Q columns of wqkv/bqkv at parameter-prep time.
    qkv = jnp.dot(y.astype(cd), wqkv_ref[0].astype(cd),
                  preferred_element_type=jnp.float32) + bqkv_ref[0]   # [S, 3D]

    for h in range(num_heads):                      # static unroll over heads
        qh = qkv[:, h * dk:(h + 1) * dk].astype(cd)             # [S, dk]
        kh = qkv[:, D + h * dk:D + (h + 1) * dk].astype(cd)
        vh = qkv[:, 2 * D + h * dk:2 * D + (h + 1) * dk].astype(cd)
        # q @ k^T without an explicit transpose: contract the last dims.
        s = lax.dot_general(qh, kh, (((1,), (1,)), ((), ())),
                            preferred_element_type=jnp.float32) + bias
        s = s - jnp.max(s, axis=-1, keepdims=True)
        e = jnp.exp(s)
        p = e * pl.reciprocal(jnp.sum(e, axis=-1, keepdims=True),
                              approx=_APPROX_RECIP)             # [S, S]

        # Attention probabilities are only materialized for the final layer.
        @pl.when(is_last)
        def _():
            att_ref[0, h] = p

        # Write this head's context into its static column slot (no concat).
        ctx_ref[:, h * dk:(h + 1) * dk] = jnp.dot(
            p.astype(cd), vh, preferred_element_type=jnp.float32)

    attn_out = jnp.dot(ctx_ref[...].astype(cd), wo_ref[0].astype(cd),
                       preferred_element_type=jnp.float32) + bo_ref[0]
    x1 = x + attn_out

    # ---- sublayer 2: pre-norm position-wise feed-forward + residual ----
    y2 = _layer_norm(x1, ln2a_ref[0], ln2b_ref[0])
    hid = jnp.maximum(
        jnp.dot(y2.astype(cd), w1_ref[0].astype(cd),
                preferred_element_type=jnp.float32) + b1_ref[0], 0.0)
    ff = jnp.dot(hid.astype(cd), w2_ref[0].astype(cd),
                 preferred_element_type=jnp.float32) + b2_ref[0]
    x2 = x1 + ff
    xact_ref[...] = x2           # carry to the next layer (VMEM resident)

    # Final LayerNorm fused into the last layer's epilogue.
    @pl.when(is_last)
    def _():
        out_ref[0] = _layer_norm(x2, fa_ref[...], fb_ref[...])


# ------------------------------ pallas_call glue --------------------------- #
def _stack(layer_params, key):
    return jnp.stack([p[key] for p in layer_params])


def encoder_forward(x, mask, mask1, mask2, layer_params, final_ln, num_heads,
                    compute_dtype=jnp.float32):
    """Encoder.forward: run N layers, return (LayerNorm(x), last layer att)."""
    # TODO(synk): the original EncoderLayer source is not provided; mask1/mask2
    # semantics are unknown, so only `mask` is applied to the attention scores.
    del mask1, mask2
    B, S, D = x.shape
    N = len(layer_params)
    dk = D // num_heads
    scale = 1.0 / math.sqrt(dk)
    d_ff = layer_params[0]["w1"].shape[1]

    # ---- parameter prep (host side): fuse QKV, fold the attention scale into
    # the Q projection, stack all layers along a leading [N, ...] axis so one
    # pallas_call iterates layers on an inner "arbitrary" grid axis.
    wqkv = jnp.concatenate([_stack(layer_params, "wq") * scale,
                            _stack(layer_params, "wk"),
                            _stack(layer_params, "wv")], axis=-1)   # [N, D, 3D]
    bqkv = jnp.concatenate([_stack(layer_params, "bq") * scale,
                            _stack(layer_params, "bk"),
                            _stack(layer_params, "bv")], axis=-1)   # [N, 1, 3D]
    wo = _stack(layer_params, "wo"); bo = _stack(layer_params, "bo")
    ln1a = _stack(layer_params, "ln1a"); ln1b = _stack(layer_params, "ln1b")
    ln2a = _stack(layer_params, "ln2a"); ln2b = _stack(layer_params, "ln2b")
    w1 = _stack(layer_params, "w1"); b1 = _stack(layer_params, "b1")
    w2 = _stack(layer_params, "w2"); b2 = _stack(layer_params, "b2")

    # Additive attention bias, computed once (hoisted mask handling).
    mask_bias = jnp.where(mask[:, 0] == 0, -1e9, 0.0).astype(jnp.float32)  # [B,S,S]

    def wspec(shape):
        # Per-layer weight block: leading layer axis indexed by the inner grid
        # dim, so layer l+1 weights prefetch behind layer l compute.
        return pl.BlockSpec((1,) + shape, lambda b, l: (l,) + (0,) * len(shape))

    in_specs = [
        pl.BlockSpec((1, S, D), lambda b, l: (b, 0, 0)),            # x
        pl.BlockSpec((1, S, S), lambda b, l: (b, 0, 0)),            # mask bias
        wspec((D, 3 * D)), wspec((1, 3 * D)),                       # wqkv, bqkv
        wspec((D, D)), wspec((1, D)),                               # wo, bo
        wspec((1, D)), wspec((1, D)),                               # ln1 a, b
        wspec((1, D)), wspec((1, D)),                               # ln2 a, b
        wspec((D, d_ff)), wspec((1, d_ff)),                         # w1, b1
        wspec((d_ff, D)), wspec((1, D)),                            # w2, b2
        pl.BlockSpec((1, D), lambda b, l: (0, 0)),                  # final ln a
        pl.BlockSpec((1, D), lambda b, l: (0, 0)),                  # final ln b
    ]
    out_specs = [
        pl.BlockSpec((1, S, D), lambda b, l: (b, 0, 0)),                 # out
        pl.BlockSpec((1, num_heads, S, S), lambda b, l: (b, 0, 0, 0)),   # att
    ]
    out_shape = [
        jax.ShapeDtypeStruct((B, S, D), jnp.float32),
        jax.ShapeDtypeStruct((B, num_heads, S, S), jnp.float32),
    ]

    kernel = functools.partial(encoder_kernel, num_heads=num_heads,
                               compute_dtype=compute_dtype)
    out, att = pl.pallas_call(
        kernel,
        grid=(B, N),
        in_specs=in_specs,
        out_specs=out_specs,
        out_shape=out_shape,
        scratch_shapes=[pltpu.VMEM((S, D), jnp.float32),   # running activation
                        pltpu.VMEM((S, D), jnp.float32)],  # attention context
        compiler_params=pltpu.CompilerParams(
            dimension_semantics=("parallel", "arbitrary")),
    )(x, mask_bias, wqkv, bqkv, wo, bo, ln1a, ln1b, ln2a, ln2b,
      w1, b1, w2, b2, final_ln["a"], final_ln["b"])
    return out, att


# -------------------------- pure-JAX reference ----------------------------- #
def _ref_forward(x, mask, layer_params, final_ln, num_heads):
    def ln(x, a, b, eps=1e-6):
        mean = jnp.mean(x, axis=-1, keepdims=True)
        d = x - mean
        var = jnp.sum(d * d, axis=-1, keepdims=True) / (x.shape[-1] - 1)
        return a * d / (jnp.sqrt(var) + eps) + b

    att = None
    for p in layer_params:
        B, S, D = x.shape
        dk = D // num_heads
        y = ln(x, p["ln1a"], p["ln1b"])
        q = (y @ p["wq"] + p["bq"]).reshape(B, S, num_heads, dk).transpose(0, 2, 1, 3)
        k = (y @ p["wk"] + p["bk"]).reshape(B, S, num_heads, dk).transpose(0, 2, 1, 3)
        v = (y @ p["wv"] + p["bv"]).reshape(B, S, num_heads, dk).transpose(0, 2, 1, 3)
        s = jnp.einsum("bhqd,bhkd->bhqk", q, k) / math.sqrt(dk)
        s = jnp.where(mask == 0, -1e9, s)
        att = jax.nn.softmax(s, axis=-1)
        ctx = jnp.einsum("bhqk,bhkd->bhqd", att, v).transpose(0, 2, 1, 3).reshape(B, S, D)
        x1 = x + ctx @ p["wo"] + p["bo"]
        y2 = ln(x1, p["ln2a"], p["ln2b"])
        x = x1 + jnp.maximum(y2 @ p["w1"] + p["b1"], 0.0) @ p["w2"] + p["b2"]
    return ln(x, final_ln["a"], final_ln["b"]), att


# --------------------------------- main ------------------------------------ #
def _init_layer_params(key, D, d_ff):
    ks = jax.random.split(key, 12)

    def lin(k, fi, fo):
        bound = 1.0 / math.sqrt(fi)
        return jax.random.uniform(k, (fi, fo), jnp.float32, -bound, bound)

    def bias(k, fi, fo):
        bound = 1.0 / math.sqrt(fi)
        return jax.random.uniform(k, (1, fo), jnp.float32, -bound, bound)

    return dict(
        wq=lin(ks[0], D, D), bq=bias(ks[1], D, D),
        wk=lin(ks[2], D, D), bk=bias(ks[3], D, D),
        wv=lin(ks[4], D, D), bv=bias(ks[5], D, D),
        wo=lin(ks[6], D, D), bo=bias(ks[7], D, D),
        ln1a=jnp.ones((1, D), jnp.float32), ln1b=jnp.zeros((1, D), jnp.float32),
        ln2a=jnp.ones((1, D), jnp.float32), ln2b=jnp.zeros((1, D), jnp.float32),
        w1=lin(ks[8], D, d_ff), b1=bias(ks[9], D, d_ff),
        w2=lin(ks[10], d_ff, D), b2=bias(ks[11], d_ff, D),
    )


if __name__ == "__main__":
    B, S, D, H, d_ff, N = 2, 8, 32, 4, 64, 2

    key = jax.random.PRNGKey(0)
    k_x, k_p = jax.random.split(key)
    x = jax.random.normal(k_x, (B, S, D), jnp.float32)

    # padding-style mask: last position of batch element 1 is masked out
    mask = jnp.ones((B, 1, S, S), jnp.float32)
    mask = mask.at[1, :, :, -1].set(0.0)
    mask1 = mask  # unused (see TODO in encoder_forward)
    mask2 = mask  # unused (see TODO in encoder_forward)

    # clones() deep-copies the SAME layer, so all N layers share identical
    # initial parameters: initialize once and reuse.
    layer_p = _init_layer_params(k_p, D, d_ff)
    layer_params = [layer_p] * N
    final_ln = dict(a=jnp.ones((1, D), jnp.float32), b=jnp.zeros((1, D), jnp.float32))

    # compute_dtype=jnp.bfloat16 is the production setting (f32 accumulation is
    # kept via preferred_element_type); f32 here for a tight numerical check.
    out, att = encoder_forward(x, mask, mask1, mask2, layer_params, final_ln, H,
                               compute_dtype=jnp.float32)
    out = jax.block_until_ready(out)
    att = jax.block_until_ready(att)

    ref_out, ref_att = _ref_forward(x, mask, layer_params, final_ln, H)
    assert out.shape == (B, S, D) and att.shape == (B, H, S, S)
    assert jnp.allclose(out, ref_out, rtol=1e-4, atol=1e-4)
    assert jnp.allclose(att, ref_att, rtol=1e-4, atol=1e-4)

    print("KERNEL_OK")
</pallas_src>

<mosaic_0001>
module attributes {stable_mosaic.version = 11 : i64} {
  func.func @encoder_kernel(%arg0: i32, %arg1: i32, %arg2: memref<1x8x32xf32, #tpu.memory_space<vmem>>, %arg3: memref<1x8x8xf32, #tpu.memory_space<vmem>>, %arg4: memref<1x32x96xf32, #tpu.memory_space<vmem>>, %arg5: memref<1x1x96xf32, #tpu.memory_space<vmem>>, %arg6: memref<1x32x32xf32, #tpu.memory_space<vmem>>, %arg7: memref<1x1x32xf32, #tpu.memory_space<vmem>>, %arg8: memref<1x1x32xf32, #tpu.memory_space<vmem>>, %arg9: memref<1x1x32xf32, #tpu.memory_space<vmem>>, %arg10: memref<1x1x32xf32, #tpu.memory_space<vmem>>, %arg11: memref<1x1x32xf32, #tpu.memory_space<vmem>>, %arg12: memref<1x32x64xf32, #tpu.memory_space<vmem>>, %arg13: memref<1x1x64xf32, #tpu.memory_space<vmem>>, %arg14: memref<1x64x32xf32, #tpu.memory_space<vmem>>, %arg15: memref<1x1x32xf32, #tpu.memory_space<vmem>>, %arg16: memref<1x32xf32, #tpu.memory_space<vmem>>, %arg17: memref<1x32xf32, #tpu.memory_space<vmem>>, %arg18: memref<1x8x32xf32, #tpu.memory_space<vmem>>, %arg19: memref<1x4x8x8xf32, #tpu.memory_space<vmem>>, %arg20: memref<8x32xf32, #tpu.memory_space<vmem>>, %arg21: memref<8x32xf32, #tpu.memory_space<vmem>>) attributes {dimension_semantics = [#tpu.dimension_semantics<parallel>, #tpu.dimension_semantics<arbitrary>], iteration_bounds = array<i64: 2, 2>, scalar_prefetch = 0 : i64, scratch_operands = 2 : i64, tpu.core_type = #tpu.core_type<tc>, window_params = [{transform_indices = @transform_0, window_bounds = array<i64: 1, 8, 32>}, {transform_indices = @transform_1, window_bounds = array<i64: 1, 8, 8>}, {transform_indices = @transform_2, window_bounds = array<i64: 1, 32, 96>}, {transform_indices = @transform_3, window_bounds = array<i64: 1, 1, 96>}, {transform_indices = @transform_4, window_bounds = array<i64: 1, 32, 32>}, {transform_indices = @transform_5, window_bounds = array<i64: 1, 1, 32>}, {transform_indices = @transform_6, window_bounds = array<i64: 1, 1, 32>}, {transform_indices = @transform_7, window_bounds = array<i64: 1, 1, 32>}, {transform_indices = @transform_8, window_bounds = array<i64: 1, 1, 32>}, {transform_indices = @transform_9, window_bounds = array<i64: 1, 1, 32>}, {transform_indices = @transform_10, window_bounds = array<i64: 1, 32, 64>}, {transform_indices = @transform_11, window_bounds = array<i64: 1, 1, 64>}, {transform_indices = @transform_12, window_bounds = array<i64: 1, 64, 32>}, {transform_indices = @transform_13, window_bounds = array<i64: 1, 1, 32>}, {pipeline_mode = #tpu.pipeline_mode<synchronous>, transform_indices = @transform_14, window_bounds = array<i64: 1, 32>}, {pipeline_mode = #tpu.pipeline_mode<synchronous>, transform_indices = @transform_15, window_bounds = array<i64: 1, 32>}, {transform_indices = @transform_16, window_bounds = array<i64: 1, 8, 32>}, {transform_indices = @transform_17, window_bounds = array<i64: 1, 4, 8, 8>}]} {
    %c1_i32 = arith.constant 1 : i32
    %0 = arith.cmpi eq, %arg1, %c1_i32 : i32
    %c0_i32 = arith.constant 0 : i32
    %1 = arith.cmpi eq, %arg1, %c0_i32 : i32
    %2 = arith.extui %1 : i1 to i32
    %c0_i32_0 = arith.constant 0 : i32
    %3 = arith.cmpi ne, %2, %c0_i32_0 : i32
    scf.if %3 {
      %c0_85 = arith.constant 0 : index
      %c0_86 = arith.constant 0 : index
      %c0_87 = arith.constant 0 : index
      %169 = vector.load %arg2[%c0_85, %c0_86, %c0_87] : memref<1x8x32xf32, #tpu.memory_space<vmem>>, vector<1x8x32xf32>
      %170 = vector.shape_cast %169 : vector<1x8x32xf32> to vector<8x32xf32>
      %c0_88 = arith.constant 0 : index
      %c0_89 = arith.constant 0 : index
      %171 = vector.load %arg20[%c0_88, %c0_89] : memref<8x32xf32, #tpu.memory_space<vmem>>, vector<8x32xf32>
      tpu.vector_store %arg20[%c0_88, %c0_89], %170 {strides = array<i32>} : memref<8x32xf32, #tpu.memory_space<vmem>>, vector<8x32xf32>,
    } else {
    }
    %c0 = arith.constant 0 : index
    %c0_1 = arith.constant 0 : index
    %4 = vector.load %arg20[%c0, %c0_1] : memref<8x32xf32, #tpu.memory_space<vmem>>, vector<8x32xf32>
    %c0_2 = arith.constant 0 : index
    %c0_3 = arith.constant 0 : index
    %c0_4 = arith.constant 0 : index
    %5 = vector.load %arg3[%c0_2, %c0_3, %c0_4] : memref<1x8x8xf32, #tpu.memory_space<vmem>>, vector<1x8x8xf32>
    %6 = vector.shape_cast %5 : vector<1x8x8xf32> to vector<8x8xf32>
    %c0_5 = arith.constant 0 : index
    %c0_6 = arith.constant 0 : index
    %c0_7 = arith.constant 0 : index
    %7 = vector.load %arg8[%c0_5, %c0_6, %c0_7] : memref<1x1x32xf32, #tpu.memory_space<vmem>>, vector<1x1x32xf32>
    %8 = vector.shape_cast %7 : vector<1x1x32xf32> to vector<1x32xf32>
    %c0_8 = arith.constant 0 : index
    %c0_9 = arith.constant 0 : index
    %c0_10 = arith.constant 0 : index
    %9 = vector.load %arg9[%c0_8, %c0_9, %c0_10] : memref<1x1x32xf32, #tpu.memory_space<vmem>>, vector<1x1x32xf32>
    %10 = vector.shape_cast %9 : vector<1x1x32xf32> to vector<1x32xf32>
    %cst = arith.constant dense<0.000000e+00> : vector<8xf32>
    %11 = vector.multi_reduction <add>, %4, %cst [1] : vector<8x32xf32> to vector<8xf32>
    %12 = vector.shape_cast %11 : vector<8xf32> to vector<8x1xf32>
    %cst_11 = arith.constant 3.200000e+01 : f32
    %13 = vector.broadcast %cst_11 : f32 to vector<8x1xf32>
    %14 = arith.divf %12, %13 : vector<8x1xf32>
    %15 = vector.broadcast %14 : vector<8x1xf32> to vector<8x32xf32>
    %16 = arith.subf %4, %15 : vector<8x32xf32>
    %17 = arith.mulf %16, %16 : vector<8x32xf32>
    %cst_12 = arith.constant dense<0.000000e+00> : vector<8xf32>
    %18 = vector.multi_reduction <add>, %17, %cst_12 [1] : vector<8x32xf32> to vector<8xf32>
    %19 = vector.shape_cast %18 : vector<8xf32> to vector<8x1xf32>
    %cst_13 = arith.constant 0.0322580636 : f32
    %20 = vector.broadcast %cst_13 : f32 to vector<8x1xf32>
    %21 = arith.mulf %19, %20 : vector<8x1xf32>
    %22 = math.sqrt %21 : vector<8x1xf32>
    %cst_14 = arith.constant 9.99999997E-7 : f32
    %23 = vector.broadcast %cst_14 : f32 to vector<8x1xf32>
    %24 = arith.addf %22, %23 : vector<8x1xf32>
    %25 = tpu.reciprocal %24 : vector<8x1xf32> -> vector<8x1xf32>
    %26 = vector.broadcast %25 : vector<8x1xf32> to vector<8x32xf32>
    %27 = arith.mulf %16, %26 : vector<8x32xf32>
    %28 = vector.broadcast %8 : vector<1x32xf32> to vector<8x32xf32>
    %29 = arith.mulf %28, %27 : vector<8x32xf32>
    %30 = vector.broadcast %10 : vector<1x32xf32> to vector<8x32xf32>
    %31 = arith.addf %29, %30 : vector<8x32xf32>
    %c0_15 = arith.constant 0 : index
    %c0_16 = arith.constant 0 : index
    %c0_17 = arith.constant 0 : index
    %32 = vector.load %arg4[%c0_15, %c0_16, %c0_17] : memref<1x32x96xf32, #tpu.memory_space<vmem>>, vector<1x32x96xf32>
    %33 = vector.shape_cast %32 : vector<1x32x96xf32> to vector<32x96xf32>
    %cst_18 = arith.constant dense<0.000000e+00> : vector<8x96xf32>
    %34 = tpu.matmul %31, %33, %cst_18 {dimension_numbers = #tpu.dot_dimension_numbers<[1], [0], [0], [1], [0, 0, 1, 1], [], []>} : vector<8x32xf32>, vector<32x96xf32>, vector<8x96xf32> -> vector<8x96xf32>
    %c0_19 = arith.constant 0 : index
    %c0_20 = arith.constant 0 : index
    %c0_21 = arith.constant 0 : index
    %35 = vector.load %arg5[%c0_19, %c0_20, %c0_21] : memref<1x1x96xf32, #tpu.memory_space<vmem>>, vector<1x1x96xf32>
    %36 = vector.shape_cast %35 : vector<1x1x96xf32> to vector<1x96xf32>
    %37 = vector.broadcast %36 : vector<1x96xf32> to vector<8x96xf32>
    %38 = arith.addf %34, %37 : vector<8x96xf32>
    %39 = vector.extract_strided_slice %38 {offsets = [0, 0], sizes = [8, 8], strides = [1, 1]} : vector<8x96xf32> to vector<8x8xf32>
    %40 = vector.extract_strided_slice %38 {offsets = [0, 32], sizes = [8, 8], strides = [1, 1]} : vector<8x96xf32> to vector<8x8xf32>
    %41 = vector.extract_strided_slice %38 {offsets = [0, 64], sizes = [8, 8], strides = [1, 1]} : vector<8x96xf32> to vector<8x8xf32>
    %cst_22 = arith.constant dense<0.000000e+00> : vector<8x8xf32>
    %42 = tpu.matmul %39, %40, %cst_22 {dimension_numbers = #tpu.dot_dimension_numbers<[1], [1], [0], [0], [0, 0, 1, 0], [], []>} : vector<8x8xf32>, vector<8x8xf32>, vector<8x8xf32> -> vector<8x8xf32>
    %43 = arith.addf %42, %6 : vector<8x8xf32>
    %cst_23 = arith.constant dense<0xFF800000> : vector<8xf32>
    %44 = vector.multi_reduction <maximumf>, %43, %cst_23 [1] : vector<8x8xf32> to vector<8xf32>
    %45 = vector.shape_cast %44 : vector<8xf32> to vector<8x1xf32>
    %46 = vector.broadcast %45 : vector<8x1xf32> to vector<8x8xf32>
    %47 = arith.subf %43, %46 : vector<8x8xf32>
    %48 = math.exp %47 : vector<8x8xf32>
    %cst_24 = arith.constant dense<0.000000e+00> : vector<8xf32>
    %49 = vector.multi_reduction <add>, %48, %cst_24 [1] : vector<8x8xf32> to vector<8xf32>
    %50 = vector.shape_cast %49 : vector<8xf32> to vector<8x1xf32>
    %51 = tpu.reciprocal %50 : vector<8x1xf32> -> vector<8x1xf32>
    %52 = vector.broadcast %51 : vector<8x1xf32> to vector<8x8xf32>
    %53 = arith.mulf %48, %52 : vector<8x8xf32>
    %54 = arith.extui %0 : i1 to i32
    %c0_i32_25 = arith.constant 0 : i32
    %55 = arith.cmpi ne, %54, %c0_i32_25 : i32
    scf.if %55 {
      %c0_85 = arith.constant 0 : index
      %c0_86 = arith.constant 0 : index
      %c0_87 = arith.constant 0 : index
      %c0_88 = arith.constant 0 : index
      %169 = vector.load %arg19[%c0_85, %c0_86, %c0_87, %c0_88] : memref<1x4x8x8xf32, #tpu.memory_space<vmem>>, vector<1x1x8x8xf32>
      %170 = vector.shape_cast %169 : vector<1x1x8x8xf32> to vector<8x8xf32>
      %171 = vector.shape_cast %53 : vector<8x8xf32> to vector<1x1x8x8xf32>
      tpu.vector_store %arg19[%c0_85, %c0_86, %c0_87, %c0_88], %171 {strides = array<i32>} : memref<1x4x8x8xf32, #tpu.memory_space<vmem>>, vector<1x1x8x8xf32>,
    } else {
    }
    %cst_26 = arith.constant dense<0.000000e+00> : vector<8x8xf32>
    %56 = tpu.matmul %53, %41, %cst_26 {dimension_numbers = #tpu.dot_dimension_numbers<[1], [0], [0], [1], [0, 0, 1, 1], [], []>} : vector<8x8xf32>, vector<8x8xf32>, vector<8x8xf32> -> vector<8x8xf32>
    %c0_27 = arith.constant 0 : index
    %c0_28 = arith.constant 0 : index
    %57 = vector.load %arg21[%c0_27, %c0_28] : memref<8x32xf32, #tpu.memory_space<vmem>>, vector<8x8xf32>
    tpu.vector_store %arg21[%c0_27, %c0_28], %56 {strides = array<i32>} : memref<8x32xf32, #tpu.memory_space<vmem>>, vector<8x8xf32>,
    %58 = vector.extract_strided_slice %38 {offsets = [0, 8], sizes = [8, 8], strides = [1, 1]} : vector<8x96xf32> to vector<8x8xf32>
    %59 = vector.extract_strided_slice %38 {offsets = [0, 40], sizes = [8, 8], strides = [1, 1]} : vector<8x96xf32> to vector<8x8xf32>
    %60 = vector.extract_strided_slice %38 {offsets = [0, 72], sizes = [8, 8], strides = [1, 1]} : vector<8x96xf32> to vector<8x8xf32>
    %cst_29 = arith.constant dense<0.000000e+00> : vector<8x8xf32>
    %61 = tpu.matmul %58, %59, %cst_29 {dimension_numbers = #tpu.dot_dimension_numbers<[1], [1], [0], [0], [0, 0, 1, 0], [], []>} : vector<8x8xf32>, vector<8x8xf32>, vector<8x8xf32> -> vector<8x8xf32>
    %62 = arith.addf %61, %6 : vector<8x8xf32>
    %cst_30 = arith.constant dense<0xFF800000> : vector<8xf32>
    %63 = vector.multi_reduction <maximumf>, %62, %cst_30 [1] : vector<8x8xf32> to vector<8xf32>
    %64 = vector.shape_cast %63 : vector<8xf32> to vector<8x1xf32>
    %65 = vector.broadcast %64 : vector<8x1xf32> to vector<8x8xf32>
    %66 = arith.subf %62, %65 : vector<8x8xf32>
    %67 = math.exp %66 : vector<8x8xf32>
    %cst_31 = arith.constant dense<0.000000e+00> : vector<8xf32>
    %68 = vector.multi_reduction <add>, %67, %cst_31 [1] : vector<8x8xf32> to vector<8xf32>
    %69 = vector.shape_cast %68 : vector<8xf32> to vector<8x1xf32>
    %70 = tpu.reciprocal %69 : vector<8x1xf32> -> vector<8x1xf32>
    %71 = vector.broadcast %70 : vector<8x1xf32> to vector<8x8xf32>
    %72 = arith.mulf %67, %71 : vector<8x8xf32>
    %73 = arith.extui %0 : i1 to i32
    %c0_i32_32 = arith.constant 0 : i32
    %74 = arith.cmpi ne, %73, %c0_i32_32 : i32
    scf.if %74 {
      %c0_85 = arith.constant 0 : index
      %c1 = arith.constant 1 : index
      %c0_86 = arith.constant 0 : index
      %c0_87 = arith.constant 0 : index
      %169 = vector.load %arg19[%c0_85, %c1, %c0_86, %c0_87] : memref<1x4x8x8xf32, #tpu.memory_space<vmem>>, vector<1x1x8x8xf32>
      %170 = vector.shape_cast %169 : vector<1x1x8x8xf32> to vector<8x8xf32>
      %171 = vector.shape_cast %72 : vector<8x8xf32> to vector<1x1x8x8xf32>
      tpu.vector_store %arg19[%c0_85, %c1, %c0_86, %c0_87], %171 {strides = array<i32>} : memref<1x4x8x8xf32, #tpu.memory_space<vmem>>, vector<1x1x8x8xf32>,
    } else {
    }
    %cst_33 = arith.constant dense<0.000000e+00> : vector<8x8xf32>
    %75 = tpu.matmul %72, %60, %cst_33 {dimension_numbers = #tpu.dot_dimension_numbers<[1], [0], [0], [1], [0, 0, 1, 1], [], []>} : vector<8x8xf32>, vector<8x8xf32>, vector<8x8xf32> -> vector<8x8xf32>
    %c0_34 = arith.constant 0 : index
    %c8 = arith.constant 8 : index
    %76 = vector.load %arg21[%c0_34, %c8] : memref<8x32xf32, #tpu.memory_space<vmem>>, vector<8x8xf32>
    tpu.vector_store %arg21[%c0_34, %c8], %75 {strides = array<i32>} : memref<8x32xf32, #tpu.memory_space<vmem>>, vector<8x8xf32>,
    %77 = vector.extract_strided_slice %38 {offsets = [0, 16], sizes = [8, 8], strides = [1, 1]} : vector<8x96xf32> to vector<8x8xf32>
    %78 = vector.extract_strided_slice %38 {offsets = [0, 48], sizes = [8, 8], strides = [1, 1]} : vector<8x96xf32> to vector<8x8xf32>
    %79 = vector.extract_strided_slice %38 {offsets = [0, 80], sizes = [8, 8], strides = [1, 1]} : vector<8x96xf32> to vector<8x8xf32>
    %cst_35 = arith.constant dense<0.000000e+00> : vector<8x8xf32>
    %80 = tpu.matmul %77, %78, %cst_35 {dimension_numbers = #tpu.dot_dimension_numbers<[1], [1], [0], [0], [0, 0, 1, 0], [], []>} : vector<8x8xf32>, vector<8x8xf32>, vector<8x8xf32> -> vector<8x8xf32>
    %81 = arith.addf %80, %6 : vector<8x8xf32>
    %cst_36 = arith.constant dense<0xFF800000> : vector<8xf32>
    %82 = vector.multi_reduction <maximumf>, %81, %cst_36 [1] : vector<8x8xf32> to vector<8xf32>
    %83 = vector.shape_cast %82 : vector<8xf32> to vector<8x1xf32>
    %84 = vector.broadcast %83 : vector<8x1xf32> to vector<8x8xf32>
    %85 = arith.subf %81, %84 : vector<8x8xf32>
    %86 = math.exp %85 : vector<8x8xf32>
    %cst_37 = arith.constant dense<0.000000e+00> : vector<8xf32>
    %87 = vector.multi_reduction <add>, %86, %cst_37 [1] : vector<8x8xf32> to vector<8xf32>
    %88 = vector.shape_cast %87 : vector<8xf32> to vector<8x1xf32>
    %89 = tpu.reciprocal %88 : vector<8x1xf32> -> vector<8x1xf32>
    %90 = vector.broadcast %89 : vector<8x1xf32> to vector<8x8xf32>
    %91 = arith.mulf %86, %90 : vector<8x8xf32>
    %92 = arith.extui %0 : i1 to i32
    %c0_i32_38 = arith.constant 0 : i32
    %93 = arith.cmpi ne, %92, %c0_i32_38 : i32
    scf.if %93 {
      %c0_85 = arith.constant 0 : index
      %c2 = arith.constant 2 : index
      %c0_86 = arith.constant 0 : index
      %c0_87 = arith.constant 0 : index
      %169 = vector.load %arg19[%c0_85, %c2, %c0_86, %c0_87] : memref<1x4x8x8xf32, #tpu.memory_space<vmem>>, vector<1x1x8x8xf32>
      %170 = vector.shape_cast %169 : vector<1x1x8x8xf32> to vector<8x8xf32>
      %171 = vector.shape_cast %91 : vector<8x8xf32> to vector<1x1x8x8xf32>
      tpu.vector_store %arg19[%c0_85, %c2, %c0_86, %c0_87], %171 {strides = array<i32>} : memref<1x4x8x8xf32, #tpu.memory_space<vmem>>, vector<1x1x8x8xf32>,
    } else {
    }
    %cst_39 = arith.constant dense<0.000000e+00> : vector<8x8xf32>
    %94 = tpu.matmul %91, %79, %cst_39 {dimension_numbers = #tpu.dot_dimension_numbers<[1], [0], [0], [1], [0, 0, 1, 1], [], []>} : vector<8x8xf32>, vector<8x8xf32>, vector<8x8xf32> -> vector<8x8xf32>
    %c0_40 = arith.constant 0 : index
    %c16 = arith.constant 16 : index
    %95 = vector.load %arg21[%c0_40, %c16] : memref<8x32xf32, #tpu.memory_space<vmem>>, vector<8x8xf32>
    tpu.vector_store %arg21[%c0_40, %c16], %94 {strides = array<i32>} : memref<8x32xf32, #tpu.memory_space<vmem>>, vector<8x8xf32>,
    %96 = vector.extract_strided_slice %38 {offsets = [0, 24], sizes = [8, 8], strides = [1, 1]} : vector<8x96xf32> to vector<8x8xf32>
    %97 = vector.extract_strided_slice %38 {offsets = [0, 56], sizes = [8, 8], strides = [1, 1]} : vector<8x96xf32> to vector<8x8xf32>
    %98 = vector.extract_strided_slice %38 {offsets = [0, 88], sizes = [8, 8], strides = [1, 1]} : vector<8x96xf32> to vector<8x8xf32>
    %cst_41 = arith.constant dense<0.000000e+00> : vector<8x8xf32>
    %99 = tpu.matmul %96, %97, %cst_41 {dimension_numbers = #tpu.dot_dimension_numbers<[1], [1], [0], [0], [0, 0, 1, 0], [], []>} : vector<8x8xf32>, vector<8x8xf32>, vector<8x8xf32> -> vector<8x8xf32>
    %100 = arith.addf %99, %6 : vector<8x8xf32>
    %cst_42 = arith.constant dense<0xFF800000> : vector<8xf32>
    %101 = vector.multi_reduction <maximumf>, %100, %cst_42 [1] : vector<8x8xf32> to vector<8xf32>
    %102 = vector.shape_cast %101 : vector<8xf32> to vector<8x1xf32>
    %103 = vector.broadcast %102 : vector<8x1xf32> to vector<8x8xf32>
    %104 = arith.subf %100, %103 : vector<8x8xf32>
    %105 = math.exp %104 : vector<8x8xf32>
    %cst_43 = arith.constant dense<0.000000e+00> : vector<8xf32>
    %106 = vector.multi_reduction <add>, %105, %cst_43 [1] : vector<8x8xf32> to vector<8xf32>
    %107 = vector.shape_cast %106 : vector<8xf32> to vector<8x1xf32>
    %108 = tpu.reciprocal %107 : vector<8x1xf32> -> vector<8x1xf32>
    %109 = vector.broadcast %108 : vector<8x1xf32> to vector<8x8xf32>
    %110 = arith.mulf %105, %109 : vector<8x8xf32>
    %111 = arith.extui %0 : i1 to i32
    %c0_i32_44 = arith.constant 0 : i32
    %112 = arith.cmpi ne, %111, %c0_i32_44 : i32
    scf.if %112 {
      %c0_85 = arith.constant 0 : index
      %c3 = arith.constant 3 : index
      %c0_86 = arith.constant 0 : index
      %c0_87 = arith.constant 0 : index
      %169 = vector.load %arg19[%c0_85, %c3, %c0_86, %c0_87] : memref<1x4x8x8xf32, #tpu.memory_space<vmem>>, vector<1x1x8x8xf32>
      %170 = vector.shape_cast %169 : vector<1x1x8x8xf32> to vector<8x8xf32>
      %171 = vector.shape_cast %110 : vector<8x8xf32> to vector<1x1x8x8xf32>
      tpu.vector_store %arg19[%c0_85, %c3, %c0_86, %c0_87], %171 {strides = array<i32>} : memref<1x4x8x8xf32, #tpu.memory_space<vmem>>, vector<1x1x8x8xf32>,
    } else {
    }
    %cst_45 = arith.constant dense<0.000000e+00> : vector<8x8xf32>
    %113 = tpu.matmul %110, %98, %cst_45 {dimension_numbers = #tpu.dot_dimension_numbers<[1], [0], [0], [1], [0, 0, 1, 1], [], []>} : vector<8x8xf32>, vector<8x8xf32>, vector<8x8xf32> -> vector<8x8xf32>
    %c0_46 = arith.constant 0 : index
    %c24 = arith.constant 24 : index
    %114 = vector.load %arg21[%c0_46, %c24] : memref<8x32xf32, #tpu.memory_space<vmem>>, vector<8x8xf32>
    tpu.vector_store %arg21[%c0_46, %c24], %113 {strides = array<i32>} : memref<8x32xf32, #tpu.memory_space<vmem>>, vector<8x8xf32>,
    %c0_47 = arith.constant 0 : index
    %c0_48 = arith.constant 0 : index
    %115 = vector.load %arg21[%c0_47, %c0_48] : memref<8x32xf32, #tpu.memory_space<vmem>>, vector<8x32xf32>
    %c0_49 = arith.constant 0 : index
    %c0_50 = arith.constant 0 : index
    %c0_51 = arith.constant 0 : index
    %116 = vector.load %arg6[%c0_49, %c0_50, %c0_51] : memref<1x32x32xf32, #tpu.memory_space<vmem>>, vector<1x32x32xf32>
    %117 = vector.shape_cast %116 : vector<1x32x32xf32> to vector<32x32xf32>
    %cst_52 = arith.constant dense<0.000000e+00> : vector<8x32xf32>
    %118 = tpu.matmul %115, %117, %cst_52 {dimension_numbers = #tpu.dot_dimension_numbers<[1], [0], [0], [1], [0, 0, 1, 1], [], []>} : vector<8x32xf32>, vector<32x32xf32>, vector<8x32xf32> -> vector<8x32xf32>
    %c0_53 = arith.constant 0 : index
    %c0_54 = arith.constant 0 : index
    %c0_55 = arith.constant 0 : index
    %119 = vector.load %arg7[%c0_53, %c0_54, %c0_55] : memref<1x1x32xf32, #tpu.memory_space<vmem>>, vector<1x1x32xf32>
    %120 = vector.shape_cast %119 : vector<1x1x32xf32> to vector<1x32xf32>
    %121 = vector.broadcast %120 : vector<1x32xf32> to vector<8x32xf32>
    %122 = arith.addf %118, %121 : vector<8x32xf32>
    %123 = arith.addf %4, %122 : vector<8x32xf32>
    %c0_56 = arith.constant 0 : index
    %c0_57 = arith.constant 0 : index
    %c0_58 = arith.constant 0 : index
    %124 = vector.load %arg10[%c0_56, %c0_57, %c0_58] : memref<1x1x32xf32, #tpu.memory_space<vmem>>, vector<1x1x32xf32>
    %125 = vector.shape_cast %124 : vector<1x1x32xf32> to vector<1x32xf32>
    %c0_59 = arith.constant 0 : index
    %c0_60 = arith.constant 0 : index
    %c0_61 = arith.constant 0 : index
    %126 = vector.load %arg11[%c0_59, %c0_60, %c0_61] : memref<1x1x32xf32, #tpu.memory_space<vmem>>, vector<1x1x32xf32>
    %127 = vector.shape_cast %126 : vector<1x1x32xf32> to vector<1x32xf32>
    %cst_62 = arith.constant dense<0.000000e+00> : vector<8xf32>
    %128 = vector.multi_reduction <add>, %123, %cst_62 [1] : vector<8x32xf32> to vector<8xf32>
    %129 = vector.shape_cast %128 : vector<8xf32> to vector<8x1xf32>
    %cst_63 = arith.constant 3.200000e+01 : f32
    %130 = vector.broadcast %cst_63 : f32 to vector<8x1xf32>
    %131 = arith.divf %129, %130 : vector<8x1xf32>
    %132 = vector.broadcast %131 : vector<8x1xf32> to vector<8x32xf32>
    %133 = arith.subf %123, %132 : vector<8x32xf32>
    %134 = arith.mulf %133, %133 : vector<8x32xf32>
    %cst_64 = arith.constant dense<0.000000e+00> : vector<8xf32>
    %135 = vector.multi_reduction <add>, %134, %cst_64 [1] : vector<8x32xf32> to vector<8xf32>
    %136 = vector.shape_cast %135 : vector<8xf32> to vector<8x1xf32>
    %cst_65 = arith.constant 0.0322580636 : f32
    %137 = vector.broadcast %cst_65 : f32 to vector<8x1xf32>
    %138 = arith.mulf %136, %137 : vector<8x1xf32>
    %139 = math.sqrt %138 : vector<8x1xf32>
    %cst_66 = arith.constant 9.99999997E-7 : f32
    %140 = vector.broadcast %cst_66 : f32 to vector<8x1xf32>
    %141 = arith.addf %139, %140 : vector<8x1xf32>
    %142 = tpu.reciprocal %141 : vector<8x1xf32> -> vector<8x1xf32>
    %143 = vector.broadcast %142 : vector<8x1xf32> to vector<8x32xf32>
    %144 = arith.mulf %133, %143 : vector<8x32xf32>
    %145 = vector.broadcast %125 : vector<1x32xf32> to vector<8x32xf32>
    %146 = arith.mulf %145, %144 : vector<8x32xf32>
    %147 = vector.broadcast %127 : vector<1x32xf32> to vector<8x32xf32>
    %148 = arith.addf %146, %147 : vector<8x32xf32>
    %c0_67 = arith.constant 0 : index
    %c0_68 = arith.constant 0 : index
    %c0_69 = arith.constant 0 : index
    %149 = vector.load %arg12[%c0_67, %c0_68, %c0_69] : memref<1x32x64xf32, #tpu.memory_space<vmem>>, vector<1x32x64xf32>
    %150 = vector.shape_cast %149 : vector<1x32x64xf32> to vector<32x64xf32>
    %cst_70 = arith.constant dense<0.000000e+00> : vector<8x64xf32>
    %151 = tpu.matmul %148, %150, %cst_70 {dimension_numbers = #tpu.dot_dimension_numbers<[1], [0], [0], [1], [0, 0, 1, 1], [], []>} : vector<8x32xf32>, vector<32x64xf32>, vector<8x64xf32> -> vector<8x64xf32>
    %c0_71 = arith.constant 0 : index
    %c0_72 = arith.constant 0 : index
    %c0_73 = arith.constant 0 : index
    %152 = vector.load %arg13[%c0_71, %c0_72, %c0_73] : memref<1x1x64xf32, #tpu.memory_space<vmem>>, vector<1x1x64xf32>
    %153 = vector.shape_cast %152 : vector<1x1x64xf32> to vector<1x64xf32>
    %154 = vector.broadcast %153 : vector<1x64xf32> to vector<8x64xf32>
    %155 = arith.addf %151, %154 : vector<8x64xf32>
    %cst_74 = arith.constant 0.000000e+00 : f32
    %156 = vector.broadcast %cst_74 : f32 to vector<8x64xf32>
    %157 = arith.maximumf %155, %156 : vector<8x64xf32>
    %c0_75 = arith.constant 0 : index
    %c0_76 = arith.constant 0 : index
    %c0_77 = arith.constant 0 : index
    %158 = vector.load %arg14[%c0_75, %c0_76, %c0_77] : memref<1x64x32xf32, #tpu.memory_space<vmem>>, vector<1x64x32xf32>
    %159 = vector.shape_cast %158 : vector<1x64x32xf32> to vector<64x32xf32>
    %cst_78 = arith.constant dense<0.000000e+00> : vector<8x32xf32>
    %160 = tpu.matmul %157, %159, %cst_78 {dimension_numbers = #tpu.dot_dimension_numbers<[1], [0], [0], [1], [0, 0, 1, 1], [], []>} : vector<8x64xf32>, vector<64x32xf32>, vector<8x32xf32> -> vector<8x32xf32>
    %c0_79 = arith.constant 0 : index
    %c0_80 = arith.constant 0 : index
    %c0_81 = arith.constant 0 : index
    %161 = vector.load %arg15[%c0_79, %c0_80, %c0_81] : memref<1x1x32xf32, #tpu.memory_space<vmem>>, vector<1x1x32xf32>
    %162 = vector.shape_cast %161 : vector<1x1x32xf32> to vector<1x32xf32>
    %163 = vector.broadcast %162 : vector<1x32xf32> to vector<8x32xf32>
    %164 = arith.addf %160, %163 : vector<8x32xf32>
    %165 = arith.addf %123, %164 : vector<8x32xf32>
    %c0_82 = arith.constant 0 : index
    %c0_83 = arith.constant 0 : index
    %166 = vector.load %arg20[%c0_82, %c0_83] : memref<8x32xf32, #tpu.memory_space<vmem>>, vector<8x32xf32>
    tpu.vector_store %arg20[%c0_82, %c0_83], %165 {strides = array<i32>} : memref<8x32xf32, #tpu.memory_space<vmem>>, vector<8x32xf32>,
    %167 = arith.extui %0 : i1 to i32
    %c0_i32_84 = arith.constant 0 : i32
    %168 = arith.cmpi ne, %167, %c0_i32_84 : i32
    scf.if %168 {
      %c0_85 = arith.constant 0 : index
      %c0_86 = arith.constant 0 : index
      %169 = vector.load %arg16[%c0_85, %c0_86] : memref<1x32xf32, #tpu.memory_space<vmem>>, vector<1x32xf32>
      %c0_87 = arith.constant 0 : index
      %c0_88 = arith.constant 0 : index
      %170 = vector.load %arg17[%c0_87, %c0_88] : memref<1x32xf32, #tpu.memory_space<vmem>>, vector<1x32xf32>
      %cst_89 = arith.constant dense<0.000000e+00> : vector<8xf32>
      %171 = vector.multi_reduction <add>, %165, %cst_89 [1] : vector<8x32xf32> to vector<8xf32>
      %172 = vector.shape_cast %171 : vector<8xf32> to vector<8x1xf32>
      %cst_90 = arith.constant 3.200000e+01 : f32
      %173 = vector.broadcast %cst_90 : f32 to vector<8x1xf32>
      %174 = arith.divf %172, %173 : vector<8x1xf32>
      %175 = vector.broadcast %174 : vector<8x1xf32> to vector<8x32xf32>
      %176 = arith.subf %165, %175 : vector<8x32xf32>
      %177 = arith.mulf %176, %176 : vector<8x32xf32>
      %cst_91 = arith.constant dense<0.000000e+00> : vector<8xf32>
      %178 = vector.multi_reduction <add>, %177, %cst_91 [1] : vector<8x32xf32> to vector<8xf32>
      %179 = vector.shape_cast %178 : vector<8xf32> to vector<8x1xf32>
      %cst_92 = arith.constant 0.0322580636 : f32
      %180 = vector.broadcast %cst_92 : f32 to vector<8x1xf32>
      %181 = arith.mulf %179, %180 : vector<8x1xf32>
      %182 = math.sqrt %181 : vector<8x1xf32>
      %cst_93 = arith.constant 9.99999997E-7 : f32
      %183 = vector.broadcast %cst_93 : f32 to vector<8x1xf32>
      %184 = arith.addf %182, %183 : vector<8x1xf32>
      %185 = tpu.reciprocal %184 : vector<8x1xf32> -> vector<8x1xf32>
      %186 = vector.broadcast %185 : vector<8x1xf32> to vector<8x32xf32>
      %187 = arith.mulf %176, %186 : vector<8x32xf32>
      %188 = vector.broadcast %169 : vector<1x32xf32> to vector<8x32xf32>
      %189 = arith.mulf %188, %187 : vector<8x32xf32>
      %190 = vector.broadcast %170 : vector<1x32xf32> to vector<8x32xf32>
      %191 = arith.addf %189, %190 : vector<8x32xf32>
      %c0_94 = arith.constant 0 : index
      %c0_95 = arith.constant 0 : index
      %c0_96 = arith.constant 0 : index
      %192 = vector.load %arg18[%c0_94, %c0_95, %c0_96] : memref<1x8x32xf32, #tpu.memory_space<vmem>>, vector<1x8x32xf32>
      %193 = vector.shape_cast %192 : vector<1x8x32xf32> to vector<8x32xf32>
      %194 = vector.shape_cast %191 : vector<8x32xf32> to vector<1x8x32xf32>
      tpu.vector_store %arg18[%c0_94, %c0_95, %c0_96], %194 {strides = array<i32>} : memref<1x8x32xf32, #tpu.memory_space<vmem>>, vector<1x8x32xf32>,
    } else {
    }
    return
  }
  func.func @transform_0(%arg0: i32, %arg1: i32) -> (i32, i32, i32) {
    %c0_i32 = arith.constant 0 : i32
    %c0_i32_0 = arith.constant 0 : i32
    %c0_i32_1 = arith.constant 0 : i32
    return %arg0, %c0_i32, %c0_i32_0 : i32, i32, i32
  }
  func.func @transform_1(%arg0: i32, %arg1: i32) -> (i32, i32, i32) {
    %c0_i32 = arith.constant 0 : i32
    %c0_i32_0 = arith.constant 0 : i32
    %c0_i32_1 = arith.constant 0 : i32
    return %arg0, %c0_i32, %c0_i32_0 : i32, i32, i32
  }
  func.func @transform_2(%arg0: i32, %arg1: i32) -> (i32, i32, i32) {
    %c0_i32 = arith.constant 0 : i32
    %c0_i32_0 = arith.constant 0 : i32
    %c0_i32_1 = arith.constant 0 : i32
    return %arg1, %c0_i32, %c0_i32_0 : i32, i32, i32
  }
  func.func @transform_3(%arg0: i32, %arg1: i32) -> (i32, i32, i32) {
    %c0_i32 = arith.constant 0 : i32
    %c0_i32_0 = arith.constant 0 : i32
    %c0_i32_1 = arith.constant 0 : i32
    return %arg1, %c0_i32, %c0_i32_0 : i32, i32, i32
  }
  func.func @transform_4(%arg0: i32, %arg1: i32) -> (i32, i32, i32) {
    %c0_i32 = arith.constant 0 : i32
    %c0_i32_0 = arith.constant 0 : i32
    %c0_i32_1 = arith.constant 0 : i32
    return %arg1, %c0_i32, %c0_i32_0 : i32, i32, i32
  }
  func.func @transform_5(%arg0: i32, %arg1: i32) -> (i32, i32, i32) {
    %c0_i32 = arith.constant 0 : i32
    %c0_i32_0 = arith.constant 0 : i32
    %c0_i32_1 = arith.constant 0 : i32
    return %arg1, %c0_i32, %c0_i32_0 : i32, i32, i32
  }
  func.func @transform_6(%arg0: i32, %arg1: i32) -> (i32, i32, i32) {
    %c0_i32 = arith.constant 0 : i32
    %c0_i32_0 = arith.constant 0 : i32
    %c0_i32_1 = arith.constant 0 : i32
    return %arg1, %c0_i32, %c0_i32_0 : i32, i32, i32
  }
  func.func @transform_7(%arg0: i32, %arg1: i32) -> (i32, i32, i32) {
    %c0_i32 = arith.constant 0 : i32
    %c0_i32_0 = arith.constant 0 : i32
    %c0_i32_1 = arith.constant 0 : i32
    return %arg1, %c0_i32, %c0_i32_0 : i32, i32, i32
  }
  func.func @transform_8(%arg0: i32, %arg1: i32) -> (i32, i32, i32) {
    %c0_i32 = arith.constant 0 : i32
    %c0_i32_0 = arith.constant 0 : i32
    %c0_i32_1 = arith.constant 0 : i32
    return %arg1, %c0_i32, %c0_i32_0 : i32, i32, i32
  }
  func.func @transform_9(%arg0: i32, %arg1: i32) -> (i32, i32, i32) {
    %c0_i32 = arith.constant 0 : i32
    %c0_i32_0 = arith.constant 0 : i32
    %c0_i32_1 = arith.constant 0 : i32
    return %arg1, %c0_i32, %c0_i32_0 : i32, i32, i32
  }
  func.func @transform_10(%arg0: i32, %arg1: i32) -> (i32, i32, i32) {
    %c0_i32 = arith.constant 0 : i32
    %c0_i32_0 = arith.constant 0 : i32
    %c0_i32_1 = arith.constant 0 : i32
    return %arg1, %c0_i32, %c0_i32_0 : i32, i32, i32
  }
  func.func @transform_11(%arg0: i32, %arg1: i32) -> (i32, i32, i32) {
    %c0_i32 = arith.constant 0 : i32
    %c0_i32_0 = arith.constant 0 : i32
    %c0_i32_1 = arith.constant 0 : i32
    return %arg1, %c0_i32, %c0_i32_0 : i32, i32, i32
  }
  func.func @transform_12(%arg0: i32, %arg1: i32) -> (i32, i32, i32) {
    %c0_i32 = arith.constant 0 : i32
    %c0_i32_0 = arith.constant 0 : i32
    %c0_i32_1 = arith.constant 0 : i32
    return %arg1, %c0_i32, %c0_i32_0 : i32, i32, i32
  }
  func.func @transform_13(%arg0: i32, %arg1: i32) -> (i32, i32, i32) {
    %c0_i32 = arith.constant 0 : i32
    %c0_i32_0 = arith.constant 0 : i32
    %c0_i32_1 = arith.constant 0 : i32
    return %arg1, %c0_i32, %c0_i32_0 : i32, i32, i32
  }
  func.func @transform_14(%arg0: i32, %arg1: i32) -> (i32, i32) {
    %c0_i32 = arith.constant 0 : i32
    %c0_i32_0 = arith.constant 0 : i32
    %c0_i32_1 = arith.constant 0 : i32
    return %c0_i32, %c0_i32_0 : i32, i32
  }
  func.func @transform_15(%arg0: i32, %arg1: i32) -> (i32, i32) {
    %c0_i32 = arith.constant 0 : i32
    %c0_i32_0 = arith.constant 0 : i32
    %c0_i32_1 = arith.constant 0 : i32
    return %c0_i32, %c0_i32_0 : i32, i32
  }
  func.func @transform_16(%arg0: i32, %arg1: i32) -> (i32, i32, i32) {
    %c0_i32 = arith.constant 0 : i32
    %c0_i32_0 = arith.constant 0 : i32
    %c0_i32_1 = arith.constant 0 : i32
    return %arg0, %c0_i32, %c0_i32_0 : i32, i32, i32
  }
  func.func @transform_17(%arg0: i32, %arg1: i32) -> (i32, i32, i32, i32) {
    %c0_i32 = arith.constant 0 : i32
    %c0_i32_0 = arith.constant 0 : i32
    %c0_i32_1 = arith.constant 0 : i32
    %c0_i32_2 = arith.constant 0 : i32
    return %arg0, %c0_i32, %c0_i32_0, %c0_i32_1 : i32, i32, i32, i32
  }
}

</mosaic_0001>

<llo_original>
// kernel: tpu_custom_call.1
$region0: #{tpu_custom_call.1}
  #allocation0 [shape = 'u32[]', space=smem, size = 0x4, offset = 0x4, fixed_abs, tag = 'smem constant byte address 0x4 - core index']
  #allocation1 [shape = 'u32[144,128]{1,0:T(1,128)}', space=vmem, size = 0x12000, scoped, tag = 'internal scratch']
  #allocation2 [shape = 'f32[8,32]{1,0:T(8,128)}', space=vmem, size = 0x1000, scoped, tag = 'scratch operand']
  #allocation3 [shape = 'f32[8,32]{1,0:T(8,128)}', space=vmem, size = 0x1000, scoped, tag = 'scratch operand']
  %s0 = inlined_call_operand.hbm [shape: f32[2,8,32], index: 0, kind: input, shape index: {}]
  %s1 = inlined_call_operand.hbm [shape: f32[2,8,8], index: 1, kind: input, shape index: {}]
  %s2 = inlined_call_operand.vmem [shape: f32[2,32,96], index: 2, kind: input, shape index: {}]
  %s3 = inlined_call_operand.vmem [shape: f32[2,1,96], index: 3, kind: input, shape index: {}]
  %s4 = inlined_call_operand.vmem [shape: f32[2,32,32], index: 4, kind: input, shape index: {}]
  %s5 = inlined_call_operand.vmem [shape: f32[2,1,32], index: 5, kind: input, shape index: {}]
  %s6 = inlined_call_operand.vmem [shape: f32[2,1,32], index: 6, kind: input, shape index: {}]
  %s7 = inlined_call_operand.vmem [shape: f32[2,1,32], index: 7, kind: input, shape index: {}]
  %s8 = inlined_call_operand.vmem [shape: f32[2,1,32], index: 8, kind: input, shape index: {}]
  %s9 = inlined_call_operand.vmem [shape: f32[2,1,32], index: 9, kind: input, shape index: {}]
  %s10 = inlined_call_operand.vmem [shape: f32[2,32,64], index: 10, kind: input, shape index: {}]
  %s11 = inlined_call_operand.vmem [shape: f32[2,1,64], index: 11, kind: input, shape index: {}]
  %s12 = inlined_call_operand.vmem [shape: f32[2,64,32], index: 12, kind: input, shape index: {}]
  %s13 = inlined_call_operand.vmem [shape: f32[2,1,32], index: 13, kind: input, shape index: {}]
  %s14 = inlined_call_operand.vmem [shape: f32[1,32], index: 14, kind: input, shape index: {}]
  %s15 = inlined_call_operand.vmem [shape: f32[1,32], index: 15, kind: input, shape index: {}]
  %s16 = inlined_call_operand.hbm [shape: f32[2,8,32], index: 16, kind: output, shape index: {0}]
  %s17 = inlined_call_operand.hbm [shape: f32[2,4,8,8], index: 17, kind: output, shape index: {1}]
  %18 = xla_tuple %s16, %s17
  %s19 = sld [smem:[#allocation0]]
  $region137: #{tpu_custom_call.1} parent=0
    _
  %s21 = ssub.s32 1, %s19
  %s22 = scalar_select 0, %s21, %s19
  $region1: #{tpu_custom_call.1} parent=0
    #allocation4 [shape = 'u8[8192]{0}', space=vmem, size = 0x2000, scoped, tag = 'input window, operand 0']
    #allocation5 [shape = 's32[2]{0}', space=sflag, size = 0x8, scoped, tag = 'scoped memory for tpu_custom_call.1']
    #allocation6 [shape = 's32[2]{0}', space=sflag, size = 0x8, scoped, tag = 'scoped memory for tpu_custom_call.1']
    #allocation7 [shape = 'u8[8192]{0}', space=vmem, size = 0x2000, scoped, tag = 'input window, operand 1']
    #allocation8 [shape = 's32[2]{0}', space=sflag, size = 0x8, scoped, tag = 'scoped memory for tpu_custom_call.1']
    #allocation9 [shape = 'u8[8192]{0}', space=vmem, size = 0x2000, scoped, tag = 'output window, operand 0']
    #allocation10 [shape = 'u8[32768]{0}', space=vmem, size = 0x8000, scoped, tag = 'output window, operand 1']
    #allocation11 [shape = 's32[2]{0}', space=sflag, size = 0x8, scoped, tag = 'scoped memory for tpu_custom_call.1']
    %23 = vsyncpa [#allocation5], 0
    %s24 = scalar_lea.sflag [#allocation5], 1
    %25 = vsyncpa %s24, 0
    %26 = vsyncpa [#allocation8], 0
    %s27 = scalar_lea.sflag [#allocation8], 1
    %28 = vsyncpa %s27, 0
    %29 = vsyncpa [#allocation6], 0
    %s30 = scalar_lea.sflag [#allocation6], 1
    %31 = vsyncpa %s30, 0
    %32 = vsyncpa [#allocation11], 0
    %s33 = scalar_lea.sflag [#allocation11], 1
    %34 = vsyncpa %s33, 0
    loop: start=0, step=1, limit=6
    $region2: #{tpu_custom_call.1} parent=1 // loop_pre_header
      _
    $region3: #{tpu_custom_call.1} parent=1 // loop_header
      %s36 = sphi 0, %s40
      %p37 = scmp.ge.s32.totalorder %s36, 6
      %s43 = sphi 0, %s55
      %s44 = sphi 0, %s51
      %s45 = sphi 0, %s43
      %s46 = sphi 0, %s44
      %s47 = sphi 0, %s45
      %s48 = sphi 0, %s46
      %s58 = sphi 0, %s60
      %s61 = sphi 0, %s58
      %s62 = sphi 0, %s61
      %s78 = sphi 0, %s62
      %s84 = sphi 0, %s86
      %s87 = sphi 0, %s84
      %s88 = sphi 0, %s87
      %s104 = sphi 0, %s88
      %s110 = sphi 0, %s112
      %s113 = sphi 0, %s110
      %s114 = sphi 0, %s113
      %s130 = sphi 0, %s114
      %s136 = sphi 0, %s138
      %s139 = sphi 0, %s136
      %s140 = sphi 0, %s139
      %s156 = sphi 0, %s140
      %s162 = sphi 0, %s164
      %s165 = sphi 0, %s162
      %s166 = sphi 0, %s165
      %s182 = sphi 0, %s166
      %s188 = sphi 0, %s190
      %s191 = sphi 0, %s188
      %s192 = sphi 0, %s191
      %s208 = sphi 0, %s192
      %s214 = sphi 0, %s216
      %s217 = sphi 0, %s214
      %s218 = sphi 0, %s217
      %s234 = sphi 0, %s218
      %s240 = sphi 0, %s242
      %s243 = sphi 0, %s240
      %s244 = sphi 0, %s243
      %s260 = sphi 0, %s244
      %s266 = sphi 0, %s268
      %s269 = sphi 0, %s266
      %s270 = sphi 0, %s269
      %s286 = sphi 0, %s270
      %s292 = sphi 0, %s294
      %s295 = sphi 0, %s292
      %s296 = sphi 0, %s295
      %s312 = sphi 0, %s296
      %s318 = sphi 0, %s320
      %s321 = sphi 0, %s318
      %s322 = sphi 0, %s321
      %s338 = sphi 0, %s322
      %s344 = sphi 0, %s346
      %s347 = sphi 0, %s344
      %s348 = sphi 0, %s347
      %s364 = sphi 0, %s348
      %s370 = sphi 0, %s372
      %s373 = sphi 0, %s370
      %s374 = sphi 0, %s373
      %s390 = sphi 0, %s374
      %s396 = sphi 0, %s398
      %s399 = sphi 0, %s396
      %s400 = sphi 0, %s399
      %s416 = sphi 0, %s400
      %s420 = sphi 0, %s420
      %s422 = sphi 0, %s420
      %s423 = sphi 0, %s422
      %s437 = sphi 0, %s423
      %s441 = sphi 0, %s441
      %s443 = sphi 0, %s441
      %s444 = sphi 0, %s443
      %s458 = sphi 0, %s444
      %s464 = sphi 0, %s466
      %s467 = sphi 0, %s464
      %s468 = sphi 0, %s467
      %s484 = sphi 0, %s468
      %s490 = sphi 0, %s492
      %s493 = sphi 0, %s490
      %s494 = sphi 0, %s493
      %s510 = sphi 0, %s494
    $region4: #{tpu_custom_call.1} parent=1 // loop_header_branch
      %39 = sbr.rel (%p37) target = $region8
    $region5: #{tpu_custom_call.1} parent=1 // loop_body
      %s41 = ssub.s32 %s36, 1
      %s42 = ssub.s32 %s36, 2
      %s49 = sadd.s32 1, %s44
      %p50 = scmp.ge.s32.totalorder %s49, 2
      %s51 = scalar_select %p50, 0, %s49
      %s52 = sadd.s32 1, %s43
      %s53 = scalar_select %p50, %s52, %s43
      %p54 = scmp.ge.s32.totalorder %s53, 2
      %s55 = scalar_select %p54, 0, %s53
      %s56 = ssub.s32 %s43, %s55
      %p57 = scmp.eq.s32.totalorder %s56, 0
      %s59 = sadd.s32 %s58, 1
      %s60 = scalar_select %p57, %s58, %s59
      %p63 = pneg %p57
      %p64 = scmp.eq.s32.totalorder %s36, 3
      %p65 = por %p63, %p64
      %p66 = scmp.ne.s32.totalorder %s58, %s61
      %p67 = scmp.eq.s32.totalorder %s36, 0
      %p68 = por %p66, %p67
      %p69 = scmp.ne.s32.totalorder %s58, %s61
      %p70 = scmp.eq.s32.totalorder %s41, 3
      %p71 = por %p69, %p70
      %p72 = scmp.ne.s32.totalorder %s61, %s62
      %p73 = scmp.eq.s32.totalorder %s41, 0
      %p74 = por %p72, %p73
      %p75 = scmp.ne.s32.totalorder %s61, %s62
      %p76 = scmp.eq.s32.totalorder %s42, 3
      %p77 = por %p75, %p76
      %p79 = scmp.ne.s32.totalorder %s62, %s78
      %p80 = scmp.eq.s32.totalorder %s42, 0
      %p81 = por %p79, %p80
      %s82 = ssub.s32 %s43, %s55
      %p83 = scmp.eq.s32.totalorder %s82, 0
      %s85 = sadd.s32 %s84, 1
      %s86 = scalar_select %p83, %s84, %s85
      %p89 = pneg %p83
      %p90 = scmp.eq.s32.totalorder %s36, 3
      %p91 = por %p89, %p90
      %p92 = scmp.ne.s32.totalorder %s84, %s87
      %p93 = scmp.eq.s32.totalorder %s36, 0
      %p94 = por %p92, %p93
      %p95 = scmp.ne.s32.totalorder %s84, %s87
      %p96 = scmp.eq.s32.totalorder %s41, 3
      %p97 = por %p95, %p96
      %p98 = scmp.ne.s32.totalorder %s87, %s88
      %p99 = scmp.eq.s32.totalorder %s41, 0
      %p100 = por %p98, %p99
      %p101 = scmp.ne.s32.totalorder %s87, %s88
      %p102 = scmp.eq.s32.totalorder %s42, 3
      %p103 = por %p101, %p102
      %p105 = scmp.ne.s32.totalorder %s88, %s104
      %p106 = scmp.eq.s32.totalorder %s42, 0
      %p107 = por %p105, %p106
      %s108 = ssub.s32 %s44, %s51
      %p109 = scmp.eq.s32.totalorder %s108, 0
      %s111 = sadd.s32 %s110, 1
      %s112 = scalar_select %p109, %s110, %s111
      %p115 = pneg %p109
      %p116 = scmp.eq.s32.totalorder %s36, 3
      %p117 = por %p115, %p116
      %p118 = scmp.ne.s32.totalorder %s110, %s113
      %p119 = scmp.eq.s32.totalorder %s36, 0
      %p120 = por %p118, %p119
      %p121 = scmp.ne.s32.totalorder %s110, %s113
      %p122 = scmp.eq.s32.totalorder %s41, 3
      %p123 = por %p121, %p122
      %p124 = scmp.ne.s32.totalorder %s113, %s114
      %p125 = scmp.eq.s32.totalorder %s41, 0
      %p126 = por %p124, %p125
      %p127 = scmp.ne.s32.totalorder %s113, %s114
      %p128 = scmp.eq.s32.totalorder %s42, 3
      %p129 = por %p127, %p128
      %p131 = scmp.ne.s32.totalorder %s114, %s130
      %p132 = scmp.eq.s32.totalorder %s42, 0
      %p133 = por %p131, %p132
      %s134 = ssub.s32 %s44, %s51
      %p135 = scmp.eq.s32.totalorder %s134, 0
      %s137 = sadd.s32 %s136, 1
      %s138 = scalar_select %p135, %s136, %s137
      %p141 = pneg %p135
      %p142 = scmp.eq.s32.totalorder %s36, 3
      %p143 = por %p141, %p142
      %p144 = scmp.ne.s32.totalorder %s136, %s139
      %p145 = scmp.eq.s32.totalorder %s36, 0
      %p146 = por %p144, %p145
      %p147 = scmp.ne.s32.totalorder %s136, %s139
      %p148 = scmp.eq.s32.totalorder %s41, 3
      %p149 = por %p147, %p148
      %p150 = scmp.ne.s32.totalorder %s139, %s140
      %p151 = scmp.eq.s32.totalorder %s41, 0
      %p152 = por %p150, %p151
      %p153 = scmp.ne.s32.totalorder %s139, %s140
      %p154 = scmp.eq.s32.totalorder %s42, 3
      %p155 = por %p153, %p154
      %p157 = scmp.ne.s32.totalorder %s140, %s156
      %p158 = scmp.eq.s32.totalorder %s42, 0
      %p159 = por %p157, %p158
      %s160 = ssub.s32 %s44, %s51
      %p161 = scmp.eq.s32.totalorder %s160, 0
      %s163 = sadd.s32 %s162, 1
      %s164 = scalar_select %p161, %s162, %s163
      %p167 = pneg %p161
      %p168 = scmp.eq.s32.totalorder %s36, 3
      %p169 = por %p167, %p168
      %p170 = scmp.ne.s32.totalorder %s162, %s165
      %p171 = scmp.eq.s32.totalorder %s36, 0
      %p172 = por %p170, %p171
      %p173 = scmp.ne.s32.totalorder %s162, %s165
      %p174 = scmp.eq.s32.totalorder %s41, 3
      %p175 = por %p173, %p174
      %p176 = scmp.ne.s32.totalorder %s165, %s166
      %p177 = scmp.eq.s32.totalorder %s41, 0
      %p178 = por %p176, %p177
      %p179 = scmp.ne.s32.totalorder %s165, %s166
      %p180 = scmp.eq.s32.totalorder %s42, 3
      %p181 = por %p179, %p180
      %p183 = scmp.ne.s32.totalorder %s166, %s182
      %p184 = scmp.eq.s32.totalorder %s42, 0
      %p185 = por %p183, %p184
      %s186 = ssub.s32 %s44, %s51
      %p187 = scmp.eq.s32.totalorder %s186, 0
      %s189 = sadd.s32 %s188, 1
      %s190 = scalar_select %p187, %s188, %s189
      %p193 = pneg %p187
      %p194 = scmp.eq.s32.totalorder %s36, 3
      %p195 = por %p193, %p194
      %p196 = scmp.ne.s32.totalorder %s188, %s191
      %p197 = scmp.eq.s32.totalorder %s36, 0
      %p198 = por %p196, %p197
      %p199 = scmp.ne.s32.totalorder %s188, %s191
      %p200 = scmp.eq.s32.totalorder %s41, 3
      %p201 = por %p199, %p200
      %p202 = scmp.ne.s32.totalorder %s191, %s192
      %p203 = scmp.eq.s32.totalorder %s41, 0
      %p204 = por %p202, %p203
      %p205 = scmp.ne.s32.totalorder %s191, %s192
      %p206 = scmp.eq.s32.totalorder %s42, 3
      %p207 = por %p205, %p206
      %p209 = scmp.ne.s32.totalorder %s192, %s208
      %p210 = scmp.eq.s32.totalorder %s42, 0
      %p211 = por %p209, %p210
      %s212 = ssub.s32 %s44, %s51
      %p213 = scmp.eq.s32.totalorder %s212, 0
      %s215 = sadd.s32 %s214, 1
      %s216 = scalar_select %p213, %s214, %s215
      %p219 = pneg %p213
      %p220 = scmp.eq.s32.totalorder %s36, 3
      %p221 = por %p219, %p220
      %p222 = scmp.ne.s32.totalorder %s214, %s217
      %p223 = scmp.eq.s32.totalorder %s36, 0
      %p224 = por %p222, %p223
      %p225 = scmp.ne.s32.totalorder %s214, %s217
      %p226 = scmp.eq.s32.totalorder %s41, 3
      %p227 = por %p225, %p226
      %p228 = scmp.ne.s32.totalorder %s217, %s218
      %p229 = scmp.eq.s32.totalorder %s41, 0
      %p230 = por %p228, %p229
      %p231 = scmp.ne.s32.totalorder %s217, %s218
      %p232 = scmp.eq.s32.totalorder %s42, 3
      %p233 = por %p231, %p232
      %p235 = scmp.ne.s32.totalorder %s218, %s234
      %p236 = scmp.eq.s32.totalorder %s42, 0
      %p237 = por %p235, %p236
      %s238 = ssub.s32 %s44, %s51
      %p239 = scmp.eq.s32.totalorder %s238, 0
      %s241 = sadd.s32 %s240, 1
      %s242 = scalar_select %p239, %s240, %s241
      %p245 = pneg %p239
      %p246 = scmp.eq.s32.totalorder %s36, 3
      %p247 = por %p245, %p246
      %p248 = scmp.ne.s32.totalorder %s240, %s243
      %p249 = scmp.eq.s32.totalorder %s36, 0
      %p250 = por %p248, %p249
      %p251 = scmp.ne.s32.totalorder %s240, %s243
      %p252 = scmp.eq.s32.totalorder %s41, 3
      %p253 = por %p251, %p252
      %p254 = scmp.ne.s32.totalorder %s243, %s244
      %p255 = scmp.eq.s32.totalorder %s41, 0
      %p256 = por %p254, %p255
      %p257 = scmp.ne.s32.totalorder %s243, %s244
      %p258 = scmp.eq.s32.totalorder %s42, 3
      %p259 = por %p257, %p258
      %p261 = scmp.ne.s32.totalorder %s244, %s260
      %p262 = scmp.eq.s32.totalorder %s42, 0
      %p263 = por %p261, %p262
      %s264 = ssub.s32 %s44, %s51
      %p265 = scmp.eq.s32.totalorder %s264, 0
      %s267 = sadd.s32 %s266, 1
      %s268 = scalar_select %p265, %s266, %s267
      %p271 = pneg %p265
      %p272 = scmp.eq.s32.totalorder %s36, 3
      %p273 = por %p271, %p272
      %p274 = scmp.ne.s32.totalorder %s266, %s269
      %p275 = scmp.eq.s32.totalorder %s36, 0
      %p276 = por %p274, %p275
      %p277 = scmp.ne.s32.totalorder %s266, %s269
      %p278 = scmp.eq.s32.totalorder %s41, 3
      %p279 = por %p277, %p278
      %p280 = scmp.ne.s32.totalorder %s269, %s270
      %p281 = scmp.eq.s32.totalorder %s41, 0
      %p282 = por %p280, %p281
      %p283 = scmp.ne.s32.totalorder %s269, %s270
      %p284 = scmp.eq.s32.totalorder %s42, 3
      %p285 = por %p283, %p284
      %p287 = scmp.ne.s32.totalorder %s270, %s286
      %p288 = scmp.eq.s32.totalorder %s42, 0
      %p289 = por %p287, %p288
      %s290 = ssub.s32 %s44, %s51
      %p291 = scmp.eq.s32.totalorder %s290, 0
      %s293 = sadd.s32 %s292, 1
      %s294 = scalar_select %p291, %s292, %s293
      %p297 = pneg %p291
      %p298 = scmp.eq.s32.totalorder %s36, 3
      %p299 = por %p297, %p298
      %p300 = scmp.ne.s32.totalorder %s292, %s295
      %p301 = scmp.eq.s32.totalorder %s36, 0
      %p302 = por %p300, %p301
      %p303 = scmp.ne.s32.totalorder %s292, %s295
      %p304 = scmp.eq.s32.totalorder %s41, 3
      %p305 = por %p303, %p304
      %p306 = scmp.ne.s32.totalorder %s295, %s296
      %p307 = scmp.eq.s32.totalorder %s41, 0
      %p308 = por %p306, %p307
      %p309 = scmp.ne.s32.totalorder %s295, %s296
      %p310 = scmp.eq.s32.totalorder %s42, 3
      %p311 = por %p309, %p310
      %p313 = scmp.ne.s32.totalorder %s296, %s312
      %p314 = scmp.eq.s32.totalorder %s42, 0
      %p315 = por %p313, %p314
      %s316 = ssub.s32 %s44, %s51
      %p317 = scmp.eq.s32.totalorder %s316, 0
      %s319 = sadd.s32 %s318, 1
      %s320 = scalar_select %p317, %s318, %s319
      %p323 = pneg %p317
      %p324 = scmp.eq.s32.totalorder %s36, 3
      %p325 = por %p323, %p324
      %p326 = scmp.ne.s32.totalorder %s318, %s321
      %p327 = scmp.eq.s32.totalorder %s36, 0
      %p328 = por %p326, %p327
      %p329 = scmp.ne.s32.totalorder %s318, %s321
      %p330 = scmp.eq.s32.totalorder %s41, 3
      %p331 = por %p329, %p330
      %p332 = scmp.ne.s32.totalorder %s321, %s322
      %p333 = scmp.eq.s32.totalorder %s41, 0
      %p334 = por %p332, %p333
      %p335 = scmp.ne.s32.totalorder %s321, %s322
      %p336 = scmp.eq.s32.totalorder %s42, 3
      %p337 = por %p335, %p336
      %p339 = scmp.ne.s32.totalorder %s322, %s338
      %p340 = scmp.eq.s32.totalorder %s42, 0
      %p341 = por %p339, %p340
      %s342 = ssub.s32 %s44, %s51
      %p343 = scmp.eq.s32.totalorder %s342, 0
      %s345 = sadd.s32 %s344, 1
      %s346 = scalar_select %p343, %s344, %s345
      %p349 = pneg %p343
      %p350 = scmp.eq.s32.totalorder %s36, 3
      %p351 = por %p349, %p350
      %p352 = scmp.ne.s32.totalorder %s344, %s347
      %p353 = scmp.eq.s32.totalorder %s36, 0
      %p354 = por %p352, %p353
      %p355 = scmp.ne.s32.totalorder %s344, %s347
      %p356 = scmp.eq.s32.totalorder %s41, 3
      %p357 = por %p355, %p356
      %p358 = scmp.ne.s32.totalorder %s347, %s348
      %p359 = scmp.eq.s32.totalorder %s41, 0
      %p360 = por %p358, %p359
      %p361 = scmp.ne.s32.totalorder %s347, %s348
      %p362 = scmp.eq.s32.totalorder %s42, 3
      %p363 = por %p361, %p362
      %p365 = scmp.ne.s32.totalorder %s348, %s364
      %p366 = scmp.eq.s32.totalorder %s42, 0
      %p367 = por %p365, %p366
      %s368 = ssub.s32 %s44, %s51
      %p369 = scmp.eq.s32.totalorder %s368, 0
      %s371 = sadd.s32 %s370, 1
      %s372 = scalar_select %p369, %s370, %s371
      %p375 = pneg %p369
      %p376 = scmp.eq.s32.totalorder %s36, 3
      %p377 = por %p375, %p376
      %p378 = scmp.ne.s32.totalorder %s370, %s373
      %p379 = scmp.eq.s32.totalorder %s36, 0
      %p380 = por %p378, %p379
      %p381 = scmp.ne.s32.totalorder %s370, %s373
      %p382 = scmp.eq.s32.totalorder %s41, 3
      %p383 = por %p381, %p382
      %p384 = scmp.ne.s32.totalorder %s373, %s374
      %p385 = scmp.eq.s32.totalorder %s41, 0
      %p386 = por %p384, %p385
      %p387 = scmp.ne.s32.totalorder %s373, %s374
      %p388 = scmp.eq.s32.totalorder %s42, 3
      %p389 = por %p387, %p388
      %p391 = scmp.ne.s32.totalorder %s374, %s390
      %p392 = scmp.eq.s32.totalorder %s42, 0
      %p393 = por %p391, %p392
      %s394 = ssub.s32 %s44, %s51
      %p395 = scmp.eq.s32.totalorder %s394, 0
      %s397 = sadd.s32 %s396, 1
      %s398 = scalar_select %p395, %s396, %s397
      %p401 = pneg %p395
      %p402 = scmp.eq.s32.totalorder %s36, 3
      %p403 = por %p401, %p402
      %p404 = scmp.ne.s32.totalorder %s396, %s399
      %p405 = scmp.eq.s32.totalorder %s36, 0
      %p406 = por %p404, %p405
      %p407 = scmp.ne.s32.totalorder %s396, %s399
      %p408 = scmp.eq.s32.totalorder %s41, 3
      %p409 = por %p407, %p408
      %p410 = scmp.ne.s32.totalorder %s399, %s400
      %p411 = scmp.eq.s32.totalorder %s41, 0
      %p412 = por %p410, %p411
      %p413 = scmp.ne.s32.totalorder %s399, %s400
      %p414 = scmp.eq.s32.totalorder %s42, 3
      %p415 = por %p413, %p414
      %p417 = scmp.ne.s32.totalorder %s400, %s416
      %p418 = scmp.eq.s32.totalorder %s42, 0
      %p419 = por %p417, %p418
      %s421 = sadd.s32 %s420, 1
      %p424 = scmp.eq.s32.totalorder %s36, 3
      %p425 = scmp.ne.s32.totalorder %s420, %s422
      %p426 = scmp.eq.s32.totalorder %s36, 0
      %p427 = por %p425, %p426
      %p428 = scmp.ne.s32.totalorder %s420, %s422
      %p429 = scmp.eq.s32.totalorder %s41, 3
      %p430 = por %p428, %p429
      %p431 = scmp.ne.s32.totalorder %s422, %s423
      %p432 = scmp.eq.s32.totalorder %s41, 0
      %p433 = por %p431, %p432
      %p434 = scmp.ne.s32.totalorder %s422, %s423
      %p435 = scmp.eq.s32.totalorder %s42, 3
      %p436 = por %p434, %p435
      %p438 = scmp.ne.s32.totalorder %s423, %s437
      %p439 = scmp.eq.s32.totalorder %s42, 0
      %p440 = por %p438, %p439
      %s442 = sadd.s32 %s441, 1
      %p445 = scmp.eq.s32.totalorder %s36, 3
      %p446 = scmp.ne.s32.totalorder %s441, %s443
      %p447 = scmp.eq.s32.totalorder %s36, 0
      %p448 = por %p446, %p447
      %p449 = scmp.ne.s32.totalorder %s441, %s443
      %p450 = scmp.eq.s32.totalorder %s41, 3
      %p451 = por %p449, %p450
      %p452 = scmp.ne.s32.totalorder %s443, %s444
      %p453 = scmp.eq.s32.totalorder %s41, 0
      %p454 = por %p452, %p453
      %p455 = scmp.ne.s32.totalorder %s443, %s444
      %p456 = scmp.eq.s32.totalorder %s42, 3
      %p457 = por %p455, %p456
      %p459 = scmp.ne.s32.totalorder %s444, %s458
      %p460 = scmp.eq.s32.totalorder %s42, 0
      %p461 = por %p459, %p460
      %s462 = ssub.s32 %s43, %s55
      %p463 = scmp.eq.s32.totalorder %s462, 0
      %s465 = sadd.s32 %s464, 1
      %s466 = scalar_select %p463, %s464, %s465
      %p469 = pneg %p463
      %p470 = scmp.eq.s32.totalorder %s36, 3
      %p471 = por %p469, %p470
      %p472 = scmp.ne.s32.totalorder %s464, %s467
      %p473 = scmp.eq.s32.totalorder %s36, 0
      %p474 = por %p472, %p473
      %p475 = scmp.ne.s32.totalorder %s464, %s467
      %p476 = scmp.eq.s32.totalorder %s41, 3
      %p477 = por %p475, %p476
      %p478 = scmp.ne.s32.totalorder %s467, %s468
      %p479 = scmp.eq.s32.totalorder %s41, 0
      %p480 = por %p478, %p479
      %p481 = scmp.ne.s32.totalorder %s467, %s468
      %p482 = scmp.eq.s32.totalorder %s42, 3
      %p483 = por %p481, %p482
      %p485 = scmp.ne.s32.totalorder %s468, %s484
      %p486 = scmp.eq.s32.totalorder %s42, 0
      %p487 = por %p485, %p486
      %s488 = ssub.s32 %s43, %s55
      %p489 = scmp.eq.s32.totalorder %s488, 0
      %s491 = sadd.s32 %s490, 1
      %s492 = scalar_select %p489, %s490, %s491
      %p495 = pneg %p489
      %p496 = scmp.eq.s32.totalorder %s36, 3
      %p497 = por %p495, %p496
      %p498 = scmp.ne.s32.totalorder %s490, %s493
      %p499 = scmp.eq.s32.totalorder %s36, 0
      %p500 = por %p498, %p499
      %p501 = scmp.ne.s32.totalorder %s490, %s493
      %p502 = scmp.eq.s32.totalorder %s41, 3
      %p503 = por %p501, %p502
      %p504 = scmp.ne.s32.totalorder %s493, %s494
      %p505 = scmp.eq.s32.totalorder %s41, 0
      %p506 = por %p504, %p505
      %p507 = scmp.ne.s32.totalorder %s493, %s494
      %p508 = scmp.eq.s32.totalorder %s42, 3
      %p509 = por %p507, %p508
      %p511 = scmp.ne.s32.totalorder %s494, %s510
      %p512 = scmp.eq.s32.totalorder %s42, 0
      %p513 = por %p511, %p512
      %p514 = scmp.le.s32.totalorder 1, %s36
      %p515 = scmp.lt.s32.totalorder %s36, 5
      %p516 = pnand %p514, %p515
      %p517 = pneg %p516
      // Predicated region
      $region9: #{tpu_custom_call.1} parent=5 // pred_check
        _
      $region10: #{tpu_custom_call.1} parent=5 // pred_check_branch
        %519 = sbr.rel (%p516) target = $region12
      $region11: #{tpu_custom_call.1} parent=5 // pred_region
        %s520 = ssub.s32 %s36, 1
        // Predicated region
        $region13: #{tpu_custom_call.1} parent=11 // pred_check
          %p521 = pneg %p433
        $region14: #{tpu_custom_call.1} parent=11 // pred_check_branch
          %523 = sbr.rel (%p521) target = $region16
        $region15: #{tpu_custom_call.1} parent=11 // pred_region
          _
        $region16: #{tpu_custom_call.1} parent=11 // pred_fallthru
          _
        // Predicated region
        $region17: #{tpu_custom_call.1} parent=11 // pred_check
          %p524 = pneg %p454
        $region18: #{tpu_custom_call.1} parent=11 // pred_check_branch
          %526 = sbr.rel (%p524) target = $region20
        $region19: #{tpu_custom_call.1} parent=11 // pred_region
          _
        $region20: #{tpu_custom_call.1} parent=11 // pred_fallthru
          _
      $region12: #{tpu_custom_call.1} parent=5 // pred_fallthru
        _
      %p527 = scmp.lt.s32.totalorder %s36, 4
      // Predicated region
      $region21: #{tpu_custom_call.1} parent=5 // pred_check
        %p528 = pneg %p527
      $region22: #{tpu_custom_call.1} parent=5 // pred_check_branch
        %530 = sbr.rel (%p528) target = $region24
      $region23: #{tpu_custom_call.1} parent=5 // pred_region
        // Predicated region
        $region25: #{tpu_custom_call.1} parent=23 // pred_check
          %p531 = pneg %p68
        $region26: #{tpu_custom_call.1} parent=23 // pred_check_branch
          %533 = sbr.rel (%p531) target = $region28
        $region27: #{tpu_custom_call.1} parent=23 // pred_region
          %s534 = sand.u32 %s58, 1
          %s535 = scalar_lea.sflag [#allocation5], %s534
          %s536 = sand.u32 %s58, 1
          %s537 = smul.addr %s536, 8
          %s538 = scalar_lea.vmem [#allocation4], %s537
          %s540 = ssub.s32 128, 128
          %541 = vsyncadd %s535, %s540
          %s542 = smul.addr %s43, 128
          %s543 = scalar_lea.hbm %s0, %s542
          %s545 = sshll.u32 %s538, 4
          %s546 = int_to_ptr.vmem [resolvable:$true] %s545
          %548 = dma.hbm_to_vmem [thread:$0]  %s543, 128, %s546, %s535
        $region28: #{tpu_custom_call.1} parent=23 // pred_fallthru
          _
        // Predicated region
        $region29: #{tpu_custom_call.1} parent=23 // pred_check
          %p549 = pneg %p94
        $region30: #{tpu_custom_call.1} parent=23 // pred_check_branch
          %551 = sbr.rel (%p549) target = $region32
        $region31: #{tpu_custom_call.1} parent=23 // pred_region
          %s552 = sand.u32 %s84, 1
          %s553 = scalar_lea.sflag [#allocation8], %s552
          %s554 = sand.u32 %s84, 1
          %s555 = smul.addr %s554, 8
          %s556 = scalar_lea.vmem [#allocation7], %s555
          %s558 = ssub.s32 128, 128
          %559 = vsyncadd %s553, %s558
          %s560 = smul.addr %s43, 128
          %s561 = scalar_lea.hbm %s1, %s560
          %s563 = sshll.u32 %s556, 4
          %s564 = int_to_ptr.vmem [resolvable:$true] %s563
          %566 = dma.hbm_to_vmem [thread:$0]  %s561, 128, %s564, %s553
        $region32: #{tpu_custom_call.1} parent=23 // pred_fallthru
          _
        // Predicated region
        $region33: #{tpu_custom_call.1} parent=23 // pred_check
          %p567 = pneg %p120
        $region34: #{tpu_custom_call.1} parent=23 // pred_check_branch
          %569 = sbr.rel (%p567) target = $region36
        $region35: #{tpu_custom_call.1} parent=23 // pred_region
          %p570 = scmp.lt.s32.totalorder %s44, 1
          %s571 = scalar_select %p570, %s44, 1
          %s572 = smul.addr %s571, 4
          %s573 = smul.addr %s572, 8
          %s574 = scalar_lea.vmem %s2, %s573
        $region36: #{tpu_custom_call.1} parent=23 // pred_fallthru
          _
        // Predicated region
        $region37: #{tpu_custom_call.1} parent=23 // pred_check
          %p575 = pneg %p146
        $region38: #{tpu_custom_call.1} parent=23 // pred_check_branch
          %577 = sbr.rel (%p575) target = $region40
        $region39: #{tpu_custom_call.1} parent=23 // pred_region
          %p578 = scmp.lt.s32.totalorder %s44, 1
          %s579 = scalar_select %p578, %s44, 1
          %s580 = scalar_lea.vmem %s3, %s579
        $region40: #{tpu_custom_call.1} parent=23 // pred_fallthru
          _
        // Predicated region
        $region41: #{tpu_custom_call.1} parent=23 // pred_check
          %p581 = pneg %p172
        $region42: #{tpu_custom_call.1} parent=23 // pred_check_branch
          %583 = sbr.rel (%p581) target = $region44
        $region43: #{tpu_custom_call.1} parent=23 // pred_region
          %p584 = scmp.lt.s32.totalorder %s44, 1
          %s585 = scalar_select %p584, %s44, 1
          %s586 = smul.addr %s585, 4
          %s587 = smul.addr %s586, 8
          %s588 = scalar_lea.vmem %s4, %s587
        $region44: #{tpu_custom_call.1} parent=23 // pred_fallthru
          _
        // Predicated region
        $region45: #{tpu_custom_call.1} parent=23 // pred_check
          %p589 = pneg %p198
        $region46: #{tpu_custom_call.1} parent=23 // pred_check_branch
          %591 = sbr.rel (%p589) target = $region48
        $region47: #{tpu_custom_call.1} parent=23 // pred_region
          %p592 = scmp.lt.s32.totalorder %s44, 1
          %s593 = scalar_select %p592, %s44, 1
          %s594 = scalar_lea.vmem %s5, %s593
        $region48: #{tpu_custom_call.1} parent=23 // pred_fallthru
          _
        // Predicated region
        $region49: #{tpu_custom_call.1} parent=23 // pred_check
          %p595 = pneg %p224
        $region50: #{tpu_custom_call.1} parent=23 // pred_check_branch
          %597 = sbr.rel (%p595) target = $region52
        $region51: #{tpu_custom_call.1} parent=23 // pred_region
          %p598 = scmp.lt.s32.totalorder %s44, 1
          %s599 = scalar_select %p598, %s44, 1
          %s600 = scalar_lea.vmem %s6, %s599
        $region52: #{tpu_custom_call.1} parent=23 // pred_fallthru
          _
        // Predicated region
        $region53: #{tpu_custom_call.1} parent=23 // pred_check
          %p601 = pneg %p250
        $region54: #{tpu_custom_call.1} parent=23 // pred_check_branch
          %603 = sbr.rel (%p601) target = $region56
        $region55: #{tpu_custom_call.1} parent=23 // pred_region
          %p604 = scmp.lt.s32.totalorder %s44, 1
          %s605 = scalar_select %p604, %s44, 1
          %s606 = scalar_lea.vmem %s7, %s605
        $region56: #{tpu_custom_call.1} parent=23 // pred_fallthru
          _
        // Predicated region
        $region57: #{tpu_custom_call.1} parent=23 // pred_check
          %p607 = pneg %p276
        $region58: #{tpu_custom_call.1} parent=23 // pred_check_branch
          %609 = sbr.rel (%p607) target = $region60
        $region59: #{tpu_custom_call.1} parent=23 // pred_region
          %p610 = scmp.lt.s32.totalorder %s44, 1
          %s611 = scalar_select %p610, %s44, 1
          %s612 = scalar_lea.vmem %s8, %s611
        $region60: #{tpu_custom_call.1} parent=23 // pred_fallthru
          _
        // Predicated region
        $region61: #{tpu_custom_call.1} parent=23 // pred_check
          %p613 = pneg %p302
        $region62: #{tpu_custom_call.1} parent=23 // pred_check_branch
          %615 = sbr.rel (%p613) target = $region64
        $region63: #{tpu_custom_call.1} parent=23 // pred_region
          %p616 = scmp.lt.s32.totalorder %s44, 1
          %s617 = scalar_select %p616, %s44, 1
          %s618 = scalar_lea.vmem %s9, %s617
        $region64: #{tpu_custom_call.1} parent=23 // pred_fallthru
          _
        // Predicated region
        $region65: #{tpu_custom_call.1} parent=23 // pred_check
          %p619 = pneg %p328
        $region66: #{tpu_custom_call.1} parent=23 // pred_check_branch
          %621 = sbr.rel (%p619) target = $region68
        $region67: #{tpu_custom_call.1} parent=23 // pred_region
          %p622 = scmp.lt.s32.totalorder %s44, 1
          %s623 = scalar_select %p622, %s44, 1
          %s624 = smul.addr %s623, 4
          %s625 = smul.addr %s624, 8
          %s626 = scalar_lea.vmem %s10, %s625
        $region68: #{tpu_custom_call.1} parent=23 // pred_fallthru
          _
        // Predicated region
        $region69: #{tpu_custom_call.1} parent=23 // pred_check
          %p627 = pneg %p354
        $region70: #{tpu_custom_call.1} parent=23 // pred_check_branch
          %629 = sbr.rel (%p627) target = $region72
        $region71: #{tpu_custom_call.1} parent=23 // pred_region
          %p630 = scmp.lt.s32.totalorder %s44, 1
          %s631 = scalar_select %p630, %s44, 1
          %s632 = scalar_lea.vmem %s11, %s631
        $region72: #{tpu_custom_call.1} parent=23 // pred_fallthru
          _
        // Predicated region
        $region73: #{tpu_custom_call.1} parent=23 // pred_check
          %p633 = pneg %p380
        $region74: #{tpu_custom_call.1} parent=23 // pred_check_branch
          %635 = sbr.rel (%p633) target = $region76
        $region75: #{tpu_custom_call.1} parent=23 // pred_region
          %p636 = scmp.lt.s32.totalorder %s44, 1
          %s637 = scalar_select %p636, %s44, 1
          %s638 = smul.addr %s637, 8
          %s639 = smul.addr %s638, 8
          %s640 = scalar_lea.vmem %s12, %s639
        $region76: #{tpu_custom_call.1} parent=23 // pred_fallthru
          _
        // Predicated region
        $region77: #{tpu_custom_call.1} parent=23 // pred_check
          %p641 = pneg %p406
        $region78: #{tpu_custom_call.1} parent=23 // pred_check_branch
          %643 = sbr.rel (%p641) target = $region80
        $region79: #{tpu_custom_call.1} parent=23 // pred_region
          %p644 = scmp.lt.s32.totalorder %s44, 1
          %s645 = scalar_select %p644, %s44, 1
          %s646 = scalar_lea.vmem %s13, %s645
        $region80: #{tpu_custom_call.1} parent=23 // pred_fallthru
          _
      $region24: #{tpu_custom_call.1} parent=5 // pred_fallthru
        _
      %p647 = scmp.le.s32.totalorder 1, %s36
      %p648 = scmp.lt.s32.totalorder %s36, 5
      %p649 = pnand %p647, %p648
      %p650 = pneg %p649
      // Predicated region
      $region81: #{tpu_custom_call.1} parent=5 // pred_check
        _
      $region82: #{tpu_custom_call.1} parent=5 // pred_check_branch
        %652 = sbr.rel (%p649) target = $region84
      $region83: #{tpu_custom_call.1} parent=5 // pred_region
        %s653 = ssub.s32 %s36, 1
        %s654 = sand.u32 %s61, 1
        %s655 = scalar_lea.sflag [#allocation5], %s654
        %s656 = sand.u32 %s61, 1
        %s657 = smul.addr %s656, 8
        %s658 = scalar_lea.vmem [#allocation4], %s657
        // Predicated region
        $region85: #{tpu_custom_call.1} parent=83 // pred_check
          %p659 = pneg %p74
        $region86: #{tpu_custom_call.1} parent=83 // pred_check_branch
          %661 = sbr.rel (%p659) target = $region88
        $region87: #{tpu_custom_call.1} parent=83 // pred_region
          %662 = dma.done %s655, 128
        $region88: #{tpu_custom_call.1} parent=83 // pred_fallthru
          _
        %s663 = sand.u32 %s87, 1
        %s664 = scalar_lea.sflag [#allocation8], %s663
        %s665 = sand.u32 %s87, 1
        %s666 = smul.addr %s665, 8
        %s667 = scalar_lea.vmem [#allocation7], %s666
        // Predicated region
        $region89: #{tpu_custom_call.1} parent=83 // pred_check
          %p668 = pneg %p100
        $region90: #{tpu_custom_call.1} parent=83 // pred_check_branch
          %670 = sbr.rel (%p668) target = $region92
        $region91: #{tpu_custom_call.1} parent=83 // pred_region
          %671 = dma.done %s664, 128
        $region92: #{tpu_custom_call.1} parent=83 // pred_fallthru
          _
        %s672 = sand.u32 %s61, 1
        %s673 = scalar_lea.sflag [#allocation5], %s672
        %s674 = sand.u32 %s61, 1
        %s675 = smul.addr %s674, 8
        %s676 = scalar_lea.vmem [#allocation4], %s675
        %p677 = pneg %p74
        %p678 = pneg %p71
        %s679 = sand.u32 %s87, 1
        %s680 = scalar_lea.sflag [#allocation8], %s679
        %s681 = sand.u32 %s87, 1
        %s682 = smul.addr %s681, 8
        %s683 = scalar_lea.vmem [#allocation7], %s682
        %p684 = pneg %p100
        %p685 = pneg %p97
        %p686 = scmp.lt.s32.totalorder %s46, 1
        %s687 = scalar_select %p686, %s46, 1
        %s688 = smul.addr %s687, 4
        %s689 = smul.addr %s688, 8
        %s690 = scalar_lea.vmem %s2, %s689
        %p691 = pneg %p126
        %p692 = pneg %p123
        %p693 = scmp.lt.s32.totalorder %s46, 1
        %s694 = scalar_select %p693, %s46, 1
        %s695 = scalar_lea.vmem %s3, %s694
        %p696 = pneg %p152
        %p697 = pneg %p149
        %p698 = scmp.lt.s32.totalorder %s46, 1
        %s699 = scalar_select %p698, %s46, 1
        %s700 = smul.addr %s699, 4
        %s701 = smul.addr %s700, 8
        %s702 = scalar_lea.vmem %s4, %s701
        %p703 = pneg %p178
        %p704 = pneg %p175
        %p705 = scmp.lt.s32.totalorder %s46, 1
        %s706 = scalar_select %p705, %s46, 1
        %s707 = scalar_lea.vmem %s5, %s706
        %p708 = pneg %p204
        %p709 = pneg %p201
        %p710 = scmp.lt.s32.totalorder %s46, 1
        %s711 = scalar_select %p710, %s46, 1
        %s712 = scalar_lea.vmem %s6, %s711
        %p713 = pneg %p230
        %p714 = pneg %p227
        %p715 = scmp.lt.s32.totalorder %s46, 1
        %s716 = scalar_select %p715, %s46, 1
        %s717 = scalar_lea.vmem %s7, %s716
        %p718 = pneg %p256
        %p719 = pneg %p253
        %p720 = scmp.lt.s32.totalorder %s46, 1
        %s721 = scalar_select %p720, %s46, 1
        %s722 = scalar_lea.vmem %s8, %s721
        %p723 = pneg %p282
        %p724 = pneg %p279
        %p725 = scmp.lt.s32.totalorder %s46, 1
        %s726 = scalar_select %p725, %s46, 1
        %s727 = scalar_lea.vmem %s9, %s726
        %p728 = pneg %p308
        %p729 = pneg %p305
        %p730 = scmp.lt.s32.totalorder %s46, 1
        %s731 = scalar_select %p730, %s46, 1
        %s732 = smul.addr %s731, 4
        %s733 = smul.addr %s732, 8
        %s734 = scalar_lea.vmem %s10, %s733
        %p735 = pneg %p334
        %p736 = pneg %p331
        %p737 = scmp.lt.s32.totalorder %s46, 1
        %s738 = scalar_select %p737, %s46, 1
        %s739 = scalar_lea.vmem %s11, %s738
        %p740 = pneg %p360
        %p741 = pneg %p357
        %p742 = scmp.lt.s32.totalorder %s46, 1
        %s743 = scalar_select %p742, %s46, 1
        %s744 = smul.addr %s743, 8
        %s745 = smul.addr %s744, 8
        %s746 = scalar_lea.vmem %s12, %s745
        %p747 = pneg %p386
        %p748 = pneg %p383
        %p749 = scmp.lt.s32.totalorder %s46, 1
        %s750 = scalar_select %p749, %s46, 1
        %s751 = scalar_lea.vmem %s13, %s750
        %p752 = pneg %p412
        %p753 = pneg %p409
        %p754 = pneg %p433
        %p755 = pneg %p430
        %p756 = pneg %p454
        %p757 = pneg %p451
        %p758 = pneg %p480
        %p759 = pneg %p477
        %s760 = sand.u32 %s467, 1
        %s761 = scalar_lea.sflag [#allocation6], %s760
        %s762 = sand.u32 %s467, 1
        %s763 = smul.addr %s762, 8
        %s764 = scalar_lea.vmem [#allocation9], %s763
        %p765 = pneg %p506
        %p766 = pneg %p503
        %s767 = sand.u32 %s493, 1
        %s768 = scalar_lea.sflag [#allocation11], %s767
        %s769 = sand.u32 %s493, 1
        %s770 = smul.addr %s769, 32
        %s771 = scalar_lea.vmem [#allocation10], %s770
        %p772 = scmp.lt.s32.totalorder %s46, 1
        %s773 = scalar_select %p772, %s46, 1
        %s774 = smul.addr %s773, 4
        %s775 = smul.addr %s774, 8
        %s776 = scalar_lea.vmem %s2, %s775
        %p777 = scmp.lt.s32.totalorder %s46, 1
        %s778 = scalar_select %p777, %s46, 1
        %s779 = scalar_lea.vmem %s3, %s778
        %p780 = scmp.lt.s32.totalorder %s46, 1
        %s781 = scalar_select %p780, %s46, 1
        %s782 = smul.addr %s781, 4
        %s783 = smul.addr %s782, 8
        %s784 = scalar_lea.vmem %s4, %s783
        %p785 = scmp.lt.s32.totalorder %s46, 1
        %s786 = scalar_select %p785, %s46, 1
        %s787 = scalar_lea.vmem %s5, %s786
        %p788 = scmp.lt.s32.totalorder %s46, 1
        %s789 = scalar_select %p788, %s46, 1
        %s790 = scalar_lea.vmem %s6, %s789
        %p791 = scmp.lt.s32.totalorder %s46, 1
        %s792 = scalar_select %p791, %s46, 1
        %s793 = scalar_lea.vmem %s7, %s792
        %p794 = scmp.lt.s32.totalorder %s46, 1
        %s795 = scalar_select %p794, %s46, 1
        %s796 = scalar_lea.vmem %s8, %s795
        %p797 = scmp.lt.s32.totalorder %s46, 1
        %s798 = scalar_select %p797, %s46, 1
        %s799 = scalar_lea.vmem %s9, %s798
        %p800 = scmp.lt.s32.totalorder %s46, 1
        %s801 = scalar_select %p800, %s46, 1
        %s802 = smul.addr %s801, 4
        %s803 = smul.addr %s802, 8
        %s804 = scalar_lea.vmem %s10, %s803
        %p805 = scmp.lt.s32.totalorder %s46, 1
        %s806 = scalar_select %p805, %s46, 1
        %s807 = scalar_lea.vmem %s11, %s806
        %p808 = scmp.lt.s32.totalorder %s46, 1
        %s809 = scalar_select %p808, %s46, 1
        %s810 = smul.addr %s809, 8
        %s811 = smul.addr %s810, 8
        %s812 = scalar_lea.vmem %s12, %s811
        %p813 = scmp.lt.s32.totalorder %s46, 1
        %s814 = scalar_select %p813, %s46, 1
        %s815 = scalar_lea.vmem %s13, %s814
        %p816 = scmp.eq.s32.totalorder %s46, 1
        %p817 = scmp.eq.s32.totalorder %s46, 0
        // Predicated region
        $region93: #{tpu_custom_call.1} parent=83 // pred_check
          %p818 = pneg %p817
        $region94: #{tpu_custom_call.1} parent=83 // pred_check_branch
          %820 = sbr.rel (%p818) target = $region96
        $region95: #{tpu_custom_call.1} parent=83 // pred_region
          %v821 = vld [vmem:[%s658] sm:$0xff]
          %vm822 = vcmask 261120
          %823 = vst.msk [vmem:[#allocation2] sm:$0xff] %vm822, %v821
        $region96: #{tpu_custom_call.1} parent=83 // pred_fallthru
          _
        %v824 = vld [vmem:[#allocation2] sm:$0xff]
        %v825 = vld [vmem:[%s667] sm:$0xff]
        %v826 = vld [vmem:[%s790] sm:$0x1]
        %v827 = vld [vmem:[%s793] sm:$0x1]
        %vm828 = vcmask 261120
        %v829 = vsel %vm828, %v824, 0.0
        %830 = vadd.xlane.f32.xlu0 %v829
        %v831 = vpop.xlane.xlu0 %830
        %v832 = vrcp.pop 32.0
        %v833 = vmul.f32 %v831, %v832
        %v834 = vsub.f32 %v824, %v833
        %v835 = vmul.f32 %v834, %v834
        %v836 = vsel %vm828, %v835, 0.0
        %837 = vadd.xlane.f32.xlu0 %v836
        %v838 = vpop.xlane.xlu0 %837
        %v839 = vmul.f32 %v838, 0.032258064
        %v840 = vrsqrt.pop %v839
        %v841 = vmul.f32 %v839, %v840
        %vm842 = vcmp.eq.f32.partialorder %v839, inf
        %v843 = vsel %vm842, %v839, %v841
        %vm844 = vcmp.eq.f32.partialorder %v839, 0.0
        %v845 = vand.u32 %v839, 2147483648
        %v846 = vsel %vm844, %v845, %v843
        %v847 = vadd.f32 %v846, 1e-06
        %v848 = vrcp.pop %v847
        %v849 = vmul.f32 %v834, %v848
        %v851 = vlaneseq
        %v852 = vshrl.u32 %v851, 7
        %v853 = vsub.s32 0, %v852
        %v854 = vrot.slane %v826, %v853
        %v856 = vmul.f32 %v854, %v849
        %v858 = vlaneseq
        %v859 = vshrl.u32 %v858, 7
        %v860 = vsub.s32 0, %v859
        %v861 = vrot.slane %v827, %v860
        %v863 = vadd.f32 %v856, %v861
        %v864 = vld [vmem:[%s776] sm:$0xff]
        %v865 = vld [vmem:[%s776 + $0x8] sm:$0xff]
        %v866 = vld [vmem:[%s776 + $0x10] sm:$0xff]
        %v867 = vld [vmem:[%s776 + $0x18] sm:$0xff]
        %v868 = vld [vmem:[%s779] sm:$0x1]
        %v870 = vlaneseq
        %v871 = vshrl.u32 %v870, 7
        %v872 = vsub.s32 0, %v871
        %v873 = vrot.slane %v868, %v872
        %v876 = vsel %vm828, %v863, 0
        %878 = vmatprep.subr.mxu0 0.0
        %879 = vmatpush1.msra.mxu0 %v864
        %880 = vmatprep.subr.mxu0 0.0
        %881 = vmatpush1.msra.mxu0 %v865
        %882 = vmatprep.subr.mxu0 0.0
        %883 = vmatpush1.msra.mxu0 %v866
        %884 = vmatprep.subr.mxu0 0.0
        %885 = vmatpush1.msra.mxu0 %v867
        %886 = vmatprep.subr.mxu0 0.0
        %887 = vmatpush1.msra.mxu0 0.0
        %888 = vmatprep.subr.mxu0 0.0
        %889 = vmatpush1.msra.mxu0 0.0
        %890 = vmatprep.subr.mxu0 0.0
        %891 = vmatpush1.msra.mxu0 0.0
        %892 = vmatprep.subr.mxu0 0.0
        %893 = vmatpush1.msra.mxu0 0.0
        %894 = vmatprep.subr.mxu0 0.0
        %895 = vmatpush1.msra.mxu0 0.0
        %896 = vmatprep.subr.mxu0 0.0
        %897 = vmatpush1.msra.mxu0 0.0
        %898 = vmatprep.subr.mxu0 0.0
        %899 = vmatpush1.msra.mxu0 0.0
        %900 = vmatprep.subr.mxu0 0.0
        %901 = vmatpush1.msra.mxu0 0.0
        %902 = vmatprep.subr.mxu0 0.0
        %903 = vmatpush1.msra.mxu0 0.0
        %904 = vmatprep.subr.mxu0 0.0
        %905 = vmatpush1.msra.mxu0 0.0
        %906 = vmatprep.subr.mxu0 0.0
        %907 = vmatpush1.msra.mxu0 0.0
        %908 = vmatprep.subr.mxu0 0.0
        %909 = vmatpush1.msra.mxu0 0.0
        %910 = vmatprep.subr.mxu0 0.0
        %911 = vmatpush1.msra.mxu0 0.0
        %912 = vmatprep.subr.mxu0 0.0
        %913 = vmatpush1.msra.mxu0 0.0
        %914 = vmatprep.subr.mxu0 0.0
        %915 = vmatpush1.msra.mxu0 0.0
        %916 = vmatprep.subr.mxu0 0.0
        %917 = vmatpush1.msra.mxu0 0.0
        %918 = vmatprep.subr.mxu0 0.0
        %919 = vmatpush1.msra.mxu0 0.0
        %920 = vmatprep.subr.mxu0 0.0
        %921 = vmatpush1.msra.mxu0 0.0
        %922 = vmatprep.subr.mxu0 0.0
        %923 = vmatpush1.msra.mxu0 0.0
        %924 = vmatprep.subr.mxu0 0.0
        %925 = vmatpush1.msra.mxu0 0.0
        %926 = vmatprep.subr.mxu0 0.0
        %927 = vmatpush1.msra.mxu0 0.0
        %928 = vmatprep.subr.mxu0 0.0
        %929 = vmatpush1.msra.mxu0 0.0
        %930 = vmatprep.subr.mxu0 0.0
        %931 = vmatpush1.msra.mxu0 0.0
        %932 = vmatprep.subr.mxu0 0.0
        %933 = vmatpush1.msra.mxu0 0.0
        %934 = vmatprep.subr.mxu0 0.0
        %935 = vmatpush1.msra.mxu0 0.0
        %936 = vmatprep.subr.mxu0 0.0
        %937 = vmatpush1.msra.mxu0 0.0
        %938 = vmatprep.subr.mxu0 0.0
        %939 = vmatpush1.msra.mxu0 0.0
        %940 = vmatprep.subr.mxu0 0.0
        %941 = vmatpush1.msra.mxu0 0.0
        %942 = vmatprep.mubr.f32.mxu0 0.0
        %943 = vmatmul.mubr.f32.gmra.mrb[0].mxu0 %v876
        %v944 = vpop.f32.mrb[0].mxu0
        %v945 = vadd.f32 %v873, %v944
        %v946 = vpop.f32.mrb[0].mxu0
        %947 = vdwg.mxu0
        %949 = vrot.lane.b32.xlu0 %v945, 96
        %v950 = vpop.permute.xlu0 %949
        %vm951 = vcmask 64512
        %v952 = vsel %vm951, %v945, 0
        %v954 = vsel %vm951, %v950, 0
        %956 = vmatprep.subr.mxu0 0.0
        %957 = vmatpush1.xpose.msra.mxu0 %v954
        %958 = vmatprep.subr.mxu0 0.0
        %959 = vmatpush1.xpose.msra.mxu0 0.0
        %960 = vmatprep.subr.mxu0 0.0
        %961 = vmatpush1.xpose.msra.mxu0 0.0
        %962 = vmatprep.subr.mxu0 0.0
        %963 = vmatpush1.xpose.msra.mxu0 0.0
        %964 = vmatprep.subr.mxu0 0.0
        %965 = vmatpush1.xpose.msra.mxu0 0.0
        %966 = vmatprep.subr.mxu0 0.0
        %967 = vmatpush1.xpose.msra.mxu0 0.0
        %968 = vmatprep.subr.mxu0 0.0
        %969 = vmatpush1.xpose.msra.mxu0 0.0
        %970 = vmatprep.subr.mxu0 0.0
        %971 = vmatpush1.xpose.msra.mxu0 0.0
        %972 = vmatprep.subr.mxu0 0.0
        %973 = vmatpush1.xpose.msra.mxu0 0.0
        %974 = vmatprep.subr.mxu0 0.0
        %975 = vmatpush1.xpose.msra.mxu0 0.0
        %976 = vmatprep.subr.mxu0 0.0
        %977 = vmatpush1.xpose.msra.mxu0 0.0
        %978 = vmatprep.subr.mxu0 0.0
        %979 = vmatpush1.xpose.msra.mxu0 0.0
        %980 = vmatprep.subr.mxu0 0.0
        %981 = vmatpush1.xpose.msra.mxu0 0.0
        %982 = vmatprep.subr.mxu0 0.0
        %983 = vmatpush1.xpose.msra.mxu0 0.0
        %984 = vmatprep.subr.mxu0 0.0
        %985 = vmatpush1.xpose.msra.mxu0 0.0
        %986 = vmatprep.subr.mxu0 0.0
        %987 = vmatpush1.xpose.msra.mxu0 0.0
        %988 = vmatprep.subr.mxu0 0.0
        %989 = vmatpush1.xpose.msra.mxu0 0.0
        %990 = vmatprep.subr.mxu0 0.0
        %991 = vmatpush1.xpose.msra.mxu0 0.0
        %992 = vmatprep.subr.mxu0 0.0
        %993 = vmatpush1.xpose.msra.mxu0 0.0
        %994 = vmatprep.subr.mxu0 0.0
        %995 = vmatpush1.xpose.msra.mxu0 0.0
        %996 = vmatprep.subr.mxu0 0.0
        %997 = vmatpush1.xpose.msra.mxu0 0.0
        %998 = vmatprep.subr.mxu0 0.0
        %999 = vmatpush1.xpose.msra.mxu0 0.0
        %1000 = vmatprep.subr.mxu0 0.0
        %1001 = vmatpush1.xpose.msra.mxu0 0.0
        %1002 = vmatprep.subr.mxu0 0.0
        %1003 = vmatpush1.xpose.msra.mxu0 0.0
        %1004 = vmatprep.subr.mxu0 0.0
        %1005 = vmatpush1.xpose.msra.mxu0 0.0
        %1006 = vmatprep.subr.mxu0 0.0
        %1007 = vmatpush1.xpose.msra.mxu0 0.0
        %1008 = vmatprep.subr.mxu0 0.0
        %1009 = vmatpush1.xpose.msra.mxu0 0.0
        %1010 = vmatprep.subr.mxu0 0.0
        %1011 = vmatpush1.xpose.msra.mxu0 0.0
        %1012 = vmatprep.subr.mxu0 0.0
        %1013 = vmatpush1.xpose.msra.mxu0 0.0
        %1014 = vmatprep.subr.mxu0 0.0
        %1015 = vmatpush1.xpose.msra.mxu0 0.0
        %1016 = vmatprep.subr.mxu0 0.0
        %1017 = vmatpush1.xpose.msra.mxu0 0.0
        %1018 = vmatprep.subr.mxu0 0.0
        %1019 = vmatpush1.xpose.msra.mxu0 0.0
        %1020 = vmatprep.mubr.f32.mxu0 0.0
        %1021 = vmatmul.mubr.f32.gmra.mrb[0].mxu0 %v952
        %v1022 = vpop.f32.mrb[0].mxu0
        %v1023 = vadd.f32 %v825, %v1022
        %v1024 = vpop.f32.mrb[0].mxu0
        %1025 = vdwg.mxu0
        %v1026 = vsel %vm951, %v1023, -inf
        %1027 = vmax.xlane.f32.xlu0 %v1026
        %v1028 = vpop.xlane.xlu0 %1027
        %v1029 = vsub.f32 %v1023, %v1028
        %v1030 = vmul.f32 %v1029, 1.442695
        %v1031 = vpow.pop %v1030
        %v1032 = vsel %vm951, %v1031, 0.0
        %1033 = vadd.xlane.f32.xlu0 %v1032
        %v1034 = vpop.xlane.xlu0 %1033
        %v1035 = vrcp.pop %v1034
        %v1036 = vmul.f32 %v1031, %v1035
        // Predicated region
        $region97: #{tpu_custom_call.1} parent=83 // pred_check
          %p1037 = pneg %p816
        $region98: #{tpu_custom_call.1} parent=83 // pred_check_branch
          %1039 = sbr.rel (%p1037) target = $region100
        $region99: #{tpu_custom_call.1} parent=83 // pred_region
          %1040 = vst.msk [vmem:[%s771] sm:$0xff] %vm951, %v1036
        $region100: #{tpu_custom_call.1} parent=83 // pred_fallthru
          _
        %1041 = vrot.lane.b32.xlu0 %v945, 64
        %v1042 = vpop.permute.xlu0 %1041
        %v1045 = vsel %vm951, %v1036, 0
        %1047 = vmatprep.subr.mxu0 0.0
        %1048 = vmatpush1.msra.mxu0 %v1042
        %1049 = vmatprep.subr.mxu0 0.0
        %1050 = vmatpush1.msra.mxu0 0.0
        %1051 = vmatprep.subr.mxu0 0.0
        %1052 = vmatpush1.msra.mxu0 0.0
        %1053 = vmatprep.subr.mxu0 0.0
        %1054 = vmatpush1.msra.mxu0 0.0
        %1055 = vmatprep.subr.mxu0 0.0
        %1056 = vmatpush1.msra.mxu0 0.0
        %1057 = vmatprep.subr.mxu0 0.0
        %1058 = vmatpush1.msra.mxu0 0.0
        %1059 = vmatprep.subr.mxu0 0.0
        %1060 = vmatpush1.msra.mxu0 0.0
        %1061 = vmatprep.subr.mxu0 0.0
        %1062 = vmatpush1.msra.mxu0 0.0
        %1063 = vmatprep.subr.mxu0 0.0
        %1064 = vmatpush1.msra.mxu0 0.0
        %1065 = vmatprep.subr.mxu0 0.0
        %1066 = vmatpush1.msra.mxu0 0.0
        %1067 = vmatprep.subr.mxu0 0.0
        %1068 = vmatpush1.msra.mxu0 0.0
        %1069 = vmatprep.subr.mxu0 0.0
        %1070 = vmatpush1.msra.mxu0 0.0
        %1071 = vmatprep.subr.mxu0 0.0
        %1072 = vmatpush1.msra.mxu0 0.0
        %1073 = vmatprep.subr.mxu0 0.0
        %1074 = vmatpush1.msra.mxu0 0.0
        %1075 = vmatprep.subr.mxu0 0.0
        %1076 = vmatpush1.msra.mxu0 0.0
        %1077 = vmatprep.subr.mxu0 0.0
        %1078 = vmatpush1.msra.mxu0 0.0
        %1079 = vmatprep.subr.mxu0 0.0
        %1080 = vmatpush1.msra.mxu0 0.0
        %1081 = vmatprep.subr.mxu0 0.0
        %1082 = vmatpush1.msra.mxu0 0.0
        %1083 = vmatprep.subr.mxu0 0.0
        %1084 = vmatpush1.msra.mxu0 0.0
        %1085 = vmatprep.subr.mxu0 0.0
        %1086 = vmatpush1.msra.mxu0 0.0
        %1087 = vmatprep.subr.mxu0 0.0
        %1088 = vmatpush1.msra.mxu0 0.0
        %1089 = vmatprep.subr.mxu0 0.0
        %1090 = vmatpush1.msra.mxu0 0.0
        %1091 = vmatprep.subr.mxu0 0.0
        %1092 = vmatpush1.msra.mxu0 0.0
        %1093 = vmatprep.subr.mxu0 0.0
        %1094 = vmatpush1.msra.mxu0 0.0
        %1095 = vmatprep.subr.mxu0 0.0
        %1096 = vmatpush1.msra.mxu0 0.0
        %1097 = vmatprep.subr.mxu0 0.0
        %1098 = vmatpush1.msra.mxu0 0.0
        %1099 = vmatprep.subr.mxu0 0.0
        %1100 = vmatpush1.msra.mxu0 0.0
        %1101 = vmatprep.subr.mxu0 0.0
        %1102 = vmatpush1.msra.mxu0 0.0
        %1103 = vmatprep.subr.mxu0 0.0
        %1104 = vmatpush1.msra.mxu0 0.0
        %1105 = vmatprep.subr.mxu0 0.0
        %1106 = vmatpush1.msra.mxu0 0.0
        %1107 = vmatprep.subr.mxu0 0.0
        %1108 = vmatpush1.msra.mxu0 0.0
        %1109 = vmatprep.subr.mxu0 0.0
        %1110 = vmatpush1.msra.mxu0 0.0
        %1111 = vmatprep.mubr.f32.mxu0 0.0
        %1112 = vmatmul.mubr.f32.gmra.mrb[0].mxu0 %v1045
        %v1113 = vpop.f32.mrb[0].mxu0
        %v1114 = vadd.f32 0.0, %v1113
        %v1115 = vpop.f32.mrb[0].mxu0
        %1116 = vdwg.mxu0
        %1117 = vst.msk [vmem:[#allocation3] sm:$0xff] %vm951, %v1114
        %1118 = vrot.lane.b32.xlu0 %v945, 120
        %v1119 = vpop.permute.xlu0 %1118
        %1120 = vrot.lane.b32.xlu0 %v945, 88
        %v1121 = vpop.permute.xlu0 %1120
        %v1122 = vsel %vm951, %v1119, 0
        %v1124 = vsel %vm951, %v1121, 0
        %1126 = vmatprep.subr.mxu0 0.0
        %1127 = vmatpush1.xpose.msra.mxu0 %v1124
        %1128 = vmatprep.subr.mxu0 0.0
        %1129 = vmatpush1.xpose.msra.mxu0 0.0
        %1130 = vmatprep.subr.mxu0 0.0
        %1131 = vmatpush1.xpose.msra.mxu0 0.0
        %1132 = vmatprep.subr.mxu0 0.0
        %1133 = vmatpush1.xpose.msra.mxu0 0.0
        %1134 = vmatprep.subr.mxu0 0.0
        %1135 = vmatpush1.xpose.msra.mxu0 0.0
        %1136 = vmatprep.subr.mxu0 0.0
        %1137 = vmatpush1.xpose.msra.mxu0 0.0
        %1138 = vmatprep.subr.mxu0 0.0
        %1139 = vmatpush1.xpose.msra.mxu0 0.0
        %1140 = vmatprep.subr.mxu0 0.0
        %1141 = vmatpush1.xpose.msra.mxu0 0.0
        %1142 = vmatprep.subr.mxu0 0.0
        %1143 = vmatpush1.xpose.msra.mxu0 0.0
        %1144 = vmatprep.subr.mxu0 0.0
        %1145 = vmatpush1.xpose.msra.mxu0 0.0
        %1146 = vmatprep.subr.mxu0 0.0
        %1147 = vmatpush1.xpose.msra.mxu0 0.0
        %1148 = vmatprep.subr.mxu0 0.0
        %1149 = vmatpush1.xpose.msra.mxu0 0.0
        %1150 = vmatprep.subr.mxu0 0.0
        %1151 = vmatpush1.xpose.msra.mxu0 0.0
        %1152 = vmatprep.subr.mxu0 0.0
        %1153 = vmatpush1.xpose.msra.mxu0 0.0
        %1154 = vmatprep.subr.mxu0 0.0
        %1155 = vmatpush1.xpose.msra.mxu0 0.0
        %1156 = vmatprep.subr.mxu0 0.0
        %1157 = vmatpush1.xpose.msra.mxu0 0.0
        %1158 = vmatprep.subr.mxu0 0.0
        %1159 = vmatpush1.xpose.msra.mxu0 0.0
        %1160 = vmatprep.subr.mxu0 0.0
        %1161 = vmatpush1.xpose.msra.mxu0 0.0
        %1162 = vmatprep.subr.mxu0 0.0
        %1163 = vmatpush1.xpose.msra.mxu0 0.0
        %1164 = vmatprep.subr.mxu0 0.0
        %1165 = vmatpush1.xpose.msra.mxu0 0.0
        %1166 = vmatprep.subr.mxu0 0.0
        %1167 = vmatpush1.xpose.msra.mxu0 0.0
        %1168 = vmatprep.subr.mxu0 0.0
        %1169 = vmatpush1.xpose.msra.mxu0 0.0
        %1170 = vmatprep.subr.mxu0 0.0
        %1171 = vmatpush1.xpose.msra.mxu0 0.0
        %1172 = vmatprep.subr.mxu0 0.0
        %1173 = vmatpush1.xpose.msra.mxu0 0.0
        %1174 = vmatprep.subr.mxu0 0.0
        %1175 = vmatpush1.xpose.msra.mxu0 0.0
        %1176 = vmatprep.subr.mxu0 0.0
        %1177 = vmatpush1.xpose.msra.mxu0 0.0
        %1178 = vmatprep.subr.mxu0 0.0
        %1179 = vmatpush1.xpose.msra.mxu0 0.0
        %1180 = vmatprep.subr.mxu0 0.0
        %1181 = vmatpush1.xpose.msra.mxu0 0.0
        %1182 = vmatprep.subr.mxu0 0.0
        %1183 = vmatpush1.xpose.msra.mxu0 0.0
        %1184 = vmatprep.subr.mxu0 0.0
        %1185 = vmatpush1.xpose.msra.mxu0 0.0
        %1186 = vmatprep.subr.mxu0 0.0
        %1187 = vmatpush1.xpose.msra.mxu0 0.0
        %1188 = vmatprep.subr.mxu0 0.0
        %1189 = vmatpush1.xpose.msra.mxu0 0.0
        %1190 = vmatprep.mubr.f32.mxu0 0.0
        %1191 = vmatmul.mubr.f32.gmra.mrb[0].mxu0 %v1122
        %v1192 = vpop.f32.mrb[0].mxu0
        %v1193 = vadd.f32 %v825, %v1192
        %v1194 = vpop.f32.mrb[0].mxu0
        %1195 = vdwg.mxu0
        %v1196 = vsel %vm951, %v1193, -inf
        %1197 = vmax.xlane.f32.xlu0 %v1196
        %v1198 = vpop.xlane.xlu0 %1197
        %v1199 = vsub.f32 %v1193, %v1198
        %v1200 = vmul.f32 %v1199, 1.442695
        %v1201 = vpow.pop %v1200
        %v1202 = vsel %vm951, %v1201, 0.0
        %1203 = vadd.xlane.f32.xlu0 %v1202
        %v1204 = vpop.xlane.xlu0 %1203
        %v1205 = vrcp.pop %v1204
        %v1206 = vmul.f32 %v1201, %v1205
        // Predicated region
        $region101: #{tpu_custom_call.1} parent=83 // pred_check
          %p1207 = pneg %p816
        $region102: #{tpu_custom_call.1} parent=83 // pred_check_branch
          %1209 = sbr.rel (%p1207) target = $region104
        $region103: #{tpu_custom_call.1} parent=83 // pred_region
          %s1210 = scalar_lea.vmem %s771, 8 [#allocation10]
          %1211 = vst.msk [vmem:[%s1210] sm:$0xff] %vm951, %v1206
        $region104: #{tpu_custom_call.1} parent=83 // pred_fallthru
          _
        %1212 = vrot.lane.b32.xlu0 %v945, 56
        %v1213 = vpop.permute.xlu0 %1212
        %v1216 = vsel %vm951, %v1206, 0
        %1218 = vmatprep.subr.mxu0 0.0
        %1219 = vmatpush1.msra.mxu0 %v1213
        %1220 = vmatprep.subr.mxu0 0.0
        %1221 = vmatpush1.msra.mxu0 0.0
        %1222 = vmatprep.subr.mxu0 0.0
        %1223 = vmatpush1.msra.mxu0 0.0
        %1224 = vmatprep.subr.mxu0 0.0
        %1225 = vmatpush1.msra.mxu0 0.0
        %1226 = vmatprep.subr.mxu0 0.0
        %1227 = vmatpush1.msra.mxu0 0.0
        %1228 = vmatprep.subr.mxu0 0.0
        %1229 = vmatpush1.msra.mxu0 0.0
        %1230 = vmatprep.subr.mxu0 0.0
        %1231 = vmatpush1.msra.mxu0 0.0
        %1232 = vmatprep.subr.mxu0 0.0
        %1233 = vmatpush1.msra.mxu0 0.0
        %1234 = vmatprep.subr.mxu0 0.0
        %1235 = vmatpush1.msra.mxu0 0.0
        %1236 = vmatprep.subr.mxu0 0.0
        %1237 = vmatpush1.msra.mxu0 0.0
        %1238 = vmatprep.subr.mxu0 0.0
        %1239 = vmatpush1.msra.mxu0 0.0
        %1240 = vmatprep.subr.mxu0 0.0
        %1241 = vmatpush1.msra.mxu0 0.0
        %1242 = vmatprep.subr.mxu0 0.0
        %1243 = vmatpush1.msra.mxu0 0.0
        %1244 = vmatprep.subr.mxu0 0.0
        %1245 = vmatpush1.msra.mxu0 0.0
        %1246 = vmatprep.subr.mxu0 0.0
        %1247 = vmatpush1.msra.mxu0 0.0
        %1248 = vmatprep.subr.mxu0 0.0
        %1249 = vmatpush1.msra.mxu0 0.0
        %1250 = vmatprep.subr.mxu0 0.0
        %1251 = vmatpush1.msra.mxu0 0.0
        %1252 = vmatprep.subr.mxu0 0.0
        %1253 = vmatpush1.msra.mxu0 0.0
        %1254 = vmatprep.subr.mxu0 0.0
        %1255 = vmatpush1.msra.mxu0 0.0
        %1256 = vmatprep.subr.mxu0 0.0
        %1257 = vmatpush1.msra.mxu0 0.0
        %1258 = vmatprep.subr.mxu0 0.0
        %1259 = vmatpush1.msra.mxu0 0.0
        %1260 = vmatprep.subr.mxu0 0.0
        %1261 = vmatpush1.msra.mxu0 0.0
        %1262 = vmatprep.subr.mxu0 0.0
        %1263 = vmatpush1.msra.mxu0 0.0
        %1264 = vmatprep.subr.mxu0 0.0
        %1265 = vmatpush1.msra.mxu0 0.0
        %1266 = vmatprep.subr.mxu0 0.0
        %1267 = vmatpush1.msra.mxu0 0.0
        %1268 = vmatprep.subr.mxu0 0.0
        %1269 = vmatpush1.msra.mxu0 0.0
        %1270 = vmatprep.subr.mxu0 0.0
        %1271 = vmatpush1.msra.mxu0 0.0
        %1272 = vmatprep.subr.mxu0 0.0
        %1273 = vmatpush1.msra.mxu0 0.0
        %1274 = vmatprep.subr.mxu0 0.0
        %1275 = vmatpush1.msra.mxu0 0.0
        %1276 = vmatprep.subr.mxu0 0.0
        %1277 = vmatpush1.msra.mxu0 0.0
        %1278 = vmatprep.subr.mxu0 0.0
        %1279 = vmatpush1.msra.mxu0 0.0
        %1280 = vmatprep.subr.mxu0 0.0
        %1281 = vmatpush1.msra.mxu0 0.0
        %1282 = vmatprep.mubr.f32.mxu0 0.0
        %1283 = vmatmul.mubr.f32.gmra.mrb[0].mxu0 %v1216
        %v1284 = vpop.f32.mrb[0].mxu0
        %v1285 = vadd.f32 0.0, %v1284
        %v1286 = vpop.f32.mrb[0].mxu0
        %1287 = vdwg.mxu0
        %1289 = vrot.lane.b32.xlu0 %v1285, 8
        %v1290 = vpop.permute.xlu0 %1289
        %vm1292 = vcmask 130112
        %1293 = vst.msk [vmem:[#allocation3] sm:$0xff] %vm1292, %v1290
        %1294 = vrot.lane.b32.xlu0 %v945, 112
        %v1295 = vpop.permute.xlu0 %1294
        %1296 = vrot.lane.b32.xlu0 %v945, 80
        %v1297 = vpop.permute.xlu0 %1296
        %v1298 = vsel %vm951, %v1295, 0
        %v1300 = vsel %vm951, %v1297, 0
        %1302 = vmatprep.subr.mxu0 0.0
        %1303 = vmatpush1.xpose.msra.mxu0 %v1300
        %1304 = vmatprep.subr.mxu0 0.0
        %1305 = vmatpush1.xpose.msra.mxu0 0.0
        %1306 = vmatprep.subr.mxu0 0.0
        %1307 = vmatpush1.xpose.msra.mxu0 0.0
        %1308 = vmatprep.subr.mxu0 0.0
        %1309 = vmatpush1.xpose.msra.mxu0 0.0
        %1310 = vmatprep.subr.mxu0 0.0
        %1311 = vmatpush1.xpose.msra.mxu0 0.0
        %1312 = vmatprep.subr.mxu0 0.0
        %1313 = vmatpush1.xpose.msra.mxu0 0.0
        %1314 = vmatprep.subr.mxu0 0.0
        %1315 = vmatpush1.xpose.msra.mxu0 0.0
        %1316 = vmatprep.subr.mxu0 0.0
        %1317 = vmatpush1.xpose.msra.mxu0 0.0
        %1318 = vmatprep.subr.mxu0 0.0
        %1319 = vmatpush1.xpose.msra.mxu0 0.0
        %1320 = vmatprep.subr.mxu0 0.0
        %1321 = vmatpush1.xpose.msra.mxu0 0.0
        %1322 = vmatprep.subr.mxu0 0.0
        %1323 = vmatpush1.xpose.msra.mxu0 0.0
        %1324 = vmatprep.subr.mxu0 0.0
        %1325 = vmatpush1.xpose.msra.mxu0 0.0
        %1326 = vmatprep.subr.mxu0 0.0
        %1327 = vmatpush1.xpose.msra.mxu0 0.0
        %1328 = vmatprep.subr.mxu0 0.0
        %1329 = vmatpush1.xpose.msra.mxu0 0.0
        %1330 = vmatprep.subr.mxu0 0.0
        %1331 = vmatpush1.xpose.msra.mxu0 0.0
        %1332 = vmatprep.subr.mxu0 0.0
        %1333 = vmatpush1.xpose.msra.mxu0 0.0
        %1334 = vmatprep.subr.mxu0 0.0
        %1335 = vmatpush1.xpose.msra.mxu0 0.0
        %1336 = vmatprep.subr.mxu0 0.0
        %1337 = vmatpush1.xpose.msra.mxu0 0.0
        %1338 = vmatprep.subr.mxu0 0.0
        %1339 = vmatpush1.xpose.msra.mxu0 0.0
        %1340 = vmatprep.subr.mxu0 0.0
        %1341 = vmatpush1.xpose.msra.mxu0 0.0
        %1342 = vmatprep.subr.mxu0 0.0
        %1343 = vmatpush1.xpose.msra.mxu0 0.0
        %1344 = vmatprep.subr.mxu0 0.0
        %1345 = vmatpush1.xpose.msra.mxu0 0.0
        %1346 = vmatprep.subr.mxu0 0.0
        %1347 = vmatpush1.xpose.msra.mxu0 0.0
        %1348 = vmatprep.subr.mxu0 0.0
        %1349 = vmatpush1.xpose.msra.mxu0 0.0
        %1350 = vmatprep.subr.mxu0 0.0
        %1351 = vmatpush1.xpose.msra.mxu0 0.0
        %1352 = vmatprep.subr.mxu0 0.0
        %1353 = vmatpush1.xpose.msra.mxu0 0.0
        %1354 = vmatprep.subr.mxu0 0.0
        %1355 = vmatpush1.xpose.msra.mxu0 0.0
        %1356 = vmatprep.subr.mxu0 0.0
        %1357 = vmatpush1.xpose.msra.mxu0 0.0
        %1358 = vmatprep.subr.mxu0 0.0
        %1359 = vmatpush1.xpose.msra.mxu0 0.0
        %1360 = vmatprep.subr.mxu0 0.0
        %1361 = vmatpush1.xpose.msra.mxu0 0.0
        %1362 = vmatprep.subr.mxu0 0.0
        %1363 = vmatpush1.xpose.msra.mxu0 0.0
        %1364 = vmatprep.subr.mxu0 0.0
        %1365 = vmatpush1.xpose.msra.mxu0 0.0
        %1366 = vmatprep.mubr.f32.mxu0 0.0
        %1367 = vmatmul.mubr.f32.gmra.mrb[0].mxu0 %v1298
        %v1368 = vpop.f32.mrb[0].mxu0
        %v1369 = vadd.f32 %v825, %v1368
        %v1370 = vpop.f32.mrb[0].mxu0
        %1371 = vdwg.mxu0
        %v1372 = vsel %vm951, %v1369, -inf
        %1373 = vmax.xlane.f32.xlu0 %v1372
        %v1374 = vpop.xlane.xlu0 %1373
        %v1375 = vsub.f32 %v1369, %v1374
        %v1376 = vmul.f32 %v1375, 1.442695
        %v1377 = vpow.pop %v1376
        %v1378 = vsel %vm951, %v1377, 0.0
        %1379 = vadd.xlane.f32.xlu0 %v1378
        %v1380 = vpop.xlane.xlu0 %1379
        %v1381 = vrcp.pop %v1380
        %v1382 = vmul.f32 %v1377, %v1381
        // Predicated region
        $region105: #{tpu_custom_call.1} parent=83 // pred_check
          %p1383 = pneg %p816
        $region106: #{tpu_custom_call.1} parent=83 // pred_check_branch
          %1385 = sbr.rel (%p1383) target = $region108
        $region107: #{tpu_custom_call.1} parent=83 // pred_region
          %s1386 = scalar_lea.vmem %s771, 16 [#allocation10]
          %1387 = vst.msk [vmem:[%s1386] sm:$0xff] %vm951, %v1382
        $region108: #{tpu_custom_call.1} parent=83 // pred_fallthru
          _
        %1388 = vrot.lane.b32.xlu0 %v945, 48
        %v1389 = vpop.permute.xlu0 %1388
        %v1392 = vsel %vm951, %v1382, 0
        %1394 = vmatprep.subr.mxu0 0.0
        %1395 = vmatpush1.msra.mxu0 %v1389
        %1396 = vmatprep.subr.mxu0 0.0
        %1397 = vmatpush1.msra.mxu0 0.0
        %1398 = vmatprep.subr.mxu0 0.0
        %1399 = vmatpush1.msra.mxu0 0.0
        %1400 = vmatprep.subr.mxu0 0.0
        %1401 = vmatpush1.msra.mxu0 0.0
        %1402 = vmatprep.subr.mxu0 0.0
        %1403 = vmatpush1.msra.mxu0 0.0
        %1404 = vmatprep.subr.mxu0 0.0
        %1405 = vmatpush1.msra.mxu0 0.0
        %1406 = vmatprep.subr.mxu0 0.0
        %1407 = vmatpush1.msra.mxu0 0.0
        %1408 = vmatprep.subr.mxu0 0.0
        %1409 = vmatpush1.msra.mxu0 0.0
        %1410 = vmatprep.subr.mxu0 0.0
        %1411 = vmatpush1.msra.mxu0 0.0
        %1412 = vmatprep.subr.mxu0 0.0
        %1413 = vmatpush1.msra.mxu0 0.0
        %1414 = vmatprep.subr.mxu0 0.0
        %1415 = vmatpush1.msra.mxu0 0.0
        %1416 = vmatprep.subr.mxu0 0.0
        %1417 = vmatpush1.msra.mxu0 0.0
        %1418 = vmatprep.subr.mxu0 0.0
        %1419 = vmatpush1.msra.mxu0 0.0
        %1420 = vmatprep.subr.mxu0 0.0
        %1421 = vmatpush1.msra.mxu0 0.0
        %1422 = vmatprep.subr.mxu0 0.0
        %1423 = vmatpush1.msra.mxu0 0.0
        %1424 = vmatprep.subr.mxu0 0.0
        %1425 = vmatpush1.msra.mxu0 0.0
        %1426 = vmatprep.subr.mxu0 0.0
        %1427 = vmatpush1.msra.mxu0 0.0
        %1428 = vmatprep.subr.mxu0 0.0
        %1429 = vmatpush1.msra.mxu0 0.0
        %1430 = vmatprep.subr.mxu0 0.0
        %1431 = vmatpush1.msra.mxu0 0.0
        %1432 = vmatprep.subr.mxu0 0.0
        %1433 = vmatpush1.msra.mxu0 0.0
        %1434 = vmatprep.subr.mxu0 0.0
        %1435 = vmatpush1.msra.mxu0 0.0
        %1436 = vmatprep.subr.mxu0 0.0
        %1437 = vmatpush1.msra.mxu0 0.0
        %1438 = vmatprep.subr.mxu0 0.0
        %1439 = vmatpush1.msra.mxu0 0.0
        %1440 = vmatprep.subr.mxu0 0.0
        %1441 = vmatpush1.msra.mxu0 0.0
        %1442 = vmatprep.subr.mxu0 0.0
        %1443 = vmatpush1.msra.mxu0 0.0
        %1444 = vmatprep.subr.mxu0 0.0
        %1445 = vmatpush1.msra.mxu0 0.0
        %1446 = vmatprep.subr.mxu0 0.0
        %1447 = vmatpush1.msra.mxu0 0.0
        %1448 = vmatprep.subr.mxu0 0.0
        %1449 = vmatpush1.msra.mxu0 0.0
        %1450 = vmatprep.subr.mxu0 0.0
        %1451 = vmatpush1.msra.mxu0 0.0
        %1452 = vmatprep.subr.mxu0 0.0
        %1453 = vmatpush1.msra.mxu0 0.0
        %1454 = vmatprep.subr.mxu0 0.0
        %1455 = vmatpush1.msra.mxu0 0.0
        %1456 = vmatprep.subr.mxu0 0.0
        %1457 = vmatpush1.msra.mxu0 0.0
        %1458 = vmatprep.mubr.f32.mxu0 0.0
        %1459 = vmatmul.mubr.f32.gmra.mrb[0].mxu0 %v1392
        %v1460 = vpop.f32.mrb[0].mxu0
        %v1461 = vadd.f32 0.0, %v1460
        %v1462 = vpop.f32.mrb[0].mxu0
        %1463 = vdwg.mxu0
        %1465 = vrot.lane.b32.xlu0 %v1461, 16
        %v1466 = vpop.permute.xlu0 %1465
        %vm1468 = vcmask 195712
        %1469 = vst.msk [vmem:[#allocation3] sm:$0xff] %vm1468, %v1466
        %1470 = vrot.lane.b32.xlu0 %v945, 104
        %v1471 = vpop.permute.xlu0 %1470
        %1472 = vrot.lane.b32.xlu0 %v945, 72
        %v1473 = vpop.permute.xlu0 %1472
        %v1474 = vsel %vm951, %v1471, 0
        %v1476 = vsel %vm951, %v1473, 0
        %1478 = vmatprep.subr.mxu0 0.0
        %1479 = vmatpush1.xpose.msra.mxu0 %v1476
        %1480 = vmatprep.subr.mxu0 0.0
        %1481 = vmatpush1.xpose.msra.mxu0 0.0
        %1482 = vmatprep.subr.mxu0 0.0
        %1483 = vmatpush1.xpose.msra.mxu0 0.0
        %1484 = vmatprep.subr.mxu0 0.0
        %1485 = vmatpush1.xpose.msra.mxu0 0.0
        %1486 = vmatprep.subr.mxu0 0.0
        %1487 = vmatpush1.xpose.msra.mxu0 0.0
        %1488 = vmatprep.subr.mxu0 0.0
        %1489 = vmatpush1.xpose.msra.mxu0 0.0
        %1490 = vmatprep.subr.mxu0 0.0
        %1491 = vmatpush1.xpose.msra.mxu0 0.0
        %1492 = vmatprep.subr.mxu0 0.0
        %1493 = vmatpush1.xpose.msra.mxu0 0.0
        %1494 = vmatprep.subr.mxu0 0.0
        %1495 = vmatpush1.xpose.msra.mxu0 0.0
        %1496 = vmatprep.subr.mxu0 0.0
        %1497 = vmatpush1.xpose.msra.mxu0 0.0
        %1498 = vmatprep.subr.mxu0 0.0
        %1499 = vmatpush1.xpose.msra.mxu0 0.0
        %1500 = vmatprep.subr.mxu0 0.0
        %1501 = vmatpush1.xpose.msra.mxu0 0.0
        %1502 = vmatprep.subr.mxu0 0.0
        %1503 = vmatpush1.xpose.msra.mxu0 0.0
        %1504 = vmatprep.subr.mxu0 0.0
        %1505 = vmatpush1.xpose.msra.mxu0 0.0
        %1506 = vmatprep.subr.mxu0 0.0
        %1507 = vmatpush1.xpose.msra.mxu0 0.0
        %1508 = vmatprep.subr.mxu0 0.0
        %1509 = vmatpush1.xpose.msra.mxu0 0.0
        %1510 = vmatprep.subr.mxu0 0.0
        %1511 = vmatpush1.xpose.msra.mxu0 0.0
        %1512 = vmatprep.subr.mxu0 0.0
        %1513 = vmatpush1.xpose.msra.mxu0 0.0
        %1514 = vmatprep.subr.mxu0 0.0
        %1515 = vmatpush1.xpose.msra.mxu0 0.0
        %1516 = vmatprep.subr.mxu0 0.0
        %1517 = vmatpush1.xpose.msra.mxu0 0.0
        %1518 = vmatprep.subr.mxu0 0.0
        %1519 = vmatpush1.xpose.msra.mxu0 0.0
        %1520 = vmatprep.subr.mxu0 0.0
        %1521 = vmatpush1.xpose.msra.mxu0 0.0
        %1522 = vmatprep.subr.mxu0 0.0
        %1523 = vmatpush1.xpose.msra.mxu0 0.0
        %1524 = vmatprep.subr.mxu0 0.0
        %1525 = vmatpush1.xpose.msra.mxu0 0.0
        %1526 = vmatprep.subr.mxu0 0.0
        %1527 = vmatpush1.xpose.msra.mxu0 0.0
        %1528 = vmatprep.subr.mxu0 0.0
        %1529 = vmatpush1.xpose.msra.mxu0 0.0
        %1530 = vmatprep.subr.mxu0 0.0
        %1531 = vmatpush1.xpose.msra.mxu0 0.0
        %1532 = vmatprep.subr.mxu0 0.0
        %1533 = vmatpush1.xpose.msra.mxu0 0.0
        %1534 = vmatprep.subr.mxu0 0.0
        %1535 = vmatpush1.xpose.msra.mxu0 0.0
        %1536 = vmatprep.subr.mxu0 0.0
        %1537 = vmatpush1.xpose.msra.mxu0 0.0
        %1538 = vmatprep.subr.mxu0 0.0
        %1539 = vmatpush1.xpose.msra.mxu0 0.0
        %1540 = vmatprep.subr.mxu0 0.0
        %1541 = vmatpush1.xpose.msra.mxu0 0.0
        %1542 = vmatprep.mubr.f32.mxu0 0.0
        %1543 = vmatmul.mubr.f32.gmra.mrb[0].mxu0 %v1474
        %v1544 = vpop.f32.mrb[0].mxu0
        %v1545 = vadd.f32 %v825, %v1544
        %v1546 = vpop.f32.mrb[0].mxu0
        %1547 = vdwg.mxu0
        %v1548 = vsel %vm951, %v1545, -inf
        %1549 = vmax.xlane.f32.xlu0 %v1548
        %v1550 = vpop.xlane.xlu0 %1549
        %v1551 = vsub.f32 %v1545, %v1550
        %v1552 = vmul.f32 %v1551, 1.442695
        %v1553 = vpow.pop %v1552
        %v1554 = vsel %vm951, %v1553, 0.0
        %1555 = vadd.xlane.f32.xlu0 %v1554
        %v1556 = vpop.xlane.xlu0 %1555
        %v1557 = vrcp.pop %v1556
        %v1558 = vmul.f32 %v1553, %v1557
        // Predicated region
        $region109: #{tpu_custom_call.1} parent=83 // pred_check
          %p1559 = pneg %p816
        $region110: #{tpu_custom_call.1} parent=83 // pred_check_branch
          %1561 = sbr.rel (%p1559) target = $region112
        $region111: #{tpu_custom_call.1} parent=83 // pred_region
          %s1562 = scalar_lea.vmem %s771, 24 [#allocation10]
          %1563 = vst.msk [vmem:[%s1562] sm:$0xff] %vm951, %v1558
        $region112: #{tpu_custom_call.1} parent=83 // pred_fallthru
          _
        %1564 = vrot.lane.b32.xlu0 %v945, 40
        %v1565 = vpop.permute.xlu0 %1564
        %v1568 = vsel %vm951, %v1558, 0
        %1570 = vmatprep.subr.mxu0 0.0
        %1571 = vmatpush1.msra.mxu0 %v1565
        %1572 = vmatprep.subr.mxu0 0.0
        %1573 = vmatpush1.msra.mxu0 0.0
        %1574 = vmatprep.subr.mxu0 0.0
        %1575 = vmatpush1.msra.mxu0 0.0
        %1576 = vmatprep.subr.mxu0 0.0
        %1577 = vmatpush1.msra.mxu0 0.0
        %1578 = vmatprep.subr.mxu0 0.0
        %1579 = vmatpush1.msra.mxu0 0.0
        %1580 = vmatprep.subr.mxu0 0.0
        %1581 = vmatpush1.msra.mxu0 0.0
        %1582 = vmatprep.subr.mxu0 0.0
        %1583 = vmatpush1.msra.mxu0 0.0
        %1584 = vmatprep.subr.mxu0 0.0
        %1585 = vmatpush1.msra.mxu0 0.0
        %1586 = vmatprep.subr.mxu0 0.0
        %1587 = vmatpush1.msra.mxu0 0.0
        %1588 = vmatprep.subr.mxu0 0.0
        %1589 = vmatpush1.msra.mxu0 0.0
        %1590 = vmatprep.subr.mxu0 0.0
        %1591 = vmatpush1.msra.mxu0 0.0
        %1592 = vmatprep.subr.mxu0 0.0
        %1593 = vmatpush1.msra.mxu0 0.0
        %1594 = vmatprep.subr.mxu0 0.0
        %1595 = vmatpush1.msra.mxu0 0.0
        %1596 = vmatprep.subr.mxu0 0.0
        %1597 = vmatpush1.msra.mxu0 0.0
        %1598 = vmatprep.subr.mxu0 0.0
        %1599 = vmatpush1.msra.mxu0 0.0
        %1600 = vmatprep.subr.mxu0 0.0
        %1601 = vmatpush1.msra.mxu0 0.0
        %1602 = vmatprep.subr.mxu0 0.0
        %1603 = vmatpush1.msra.mxu0 0.0
        %1604 = vmatprep.subr.mxu0 0.0
        %1605 = vmatpush1.msra.mxu0 0.0
        %1606 = vmatprep.subr.mxu0 0.0
        %1607 = vmatpush1.msra.mxu0 0.0
        %1608 = vmatprep.subr.mxu0 0.0
        %1609 = vmatpush1.msra.mxu0 0.0
        %1610 = vmatprep.subr.mxu0 0.0
        %1611 = vmatpush1.msra.mxu0 0.0
        %1612 = vmatprep.subr.mxu0 0.0
        %1613 = vmatpush1.msra.mxu0 0.0
        %1614 = vmatprep.subr.mxu0 0.0
        %1615 = vmatpush1.msra.mxu0 0.0
        %1616 = vmatprep.subr.mxu0 0.0
        %1617 = vmatpush1.msra.mxu0 0.0
        %1618 = vmatprep.subr.mxu0 0.0
        %1619 = vmatpush1.msra.mxu0 0.0
        %1620 = vmatprep.subr.mxu0 0.0
        %1621 = vmatpush1.msra.mxu0 0.0
        %1622 = vmatprep.subr.mxu0 0.0
        %1623 = vmatpush1.msra.mxu0 0.0
        %1624 = vmatprep.subr.mxu0 0.0
        %1625 = vmatpush1.msra.mxu0 0.0
        %1626 = vmatprep.subr.mxu0 0.0
        %1627 = vmatpush1.msra.mxu0 0.0
        %1628 = vmatprep.subr.mxu0 0.0
        %1629 = vmatpush1.msra.mxu0 0.0
        %1630 = vmatprep.subr.mxu0 0.0
        %1631 = vmatpush1.msra.mxu0 0.0
        %1632 = vmatprep.subr.mxu0 0.0
        %1633 = vmatpush1.msra.mxu0 0.0
        %1634 = vmatprep.mubr.f32.mxu0 0.0
        %1635 = vmatmul.mubr.f32.gmra.mrb[0].mxu0 %v1568
        %v1636 = vpop.f32.mrb[0].mxu0
        %v1637 = vadd.f32 0.0, %v1636
        %v1638 = vpop.f32.mrb[0].mxu0
        %1639 = vdwg.mxu0
        %1641 = vrot.lane.b32.xlu0 %v1637, 24
        %v1642 = vpop.permute.xlu0 %1641
        %vm1644 = vcmask 261312
        %1645 = vst.msk [vmem:[#allocation3] sm:$0xff] %vm1644, %v1642
        %v1646 = vld [vmem:[#allocation3] sm:$0xff]
        %v1647 = vld [vmem:[%s784] sm:$0xff]
        %v1648 = vld [vmem:[%s784 + $0x8] sm:$0xff]
        %v1649 = vld [vmem:[%s784 + $0x10] sm:$0xff]
        %v1650 = vld [vmem:[%s784 + $0x18] sm:$0xff]
        %v1651 = vld [vmem:[%s787] sm:$0x1]
        %v1653 = vlaneseq
        %v1654 = vshrl.u32 %v1653, 7
        %v1655 = vsub.s32 0, %v1654
        %v1656 = vrot.slane %v1651, %v1655
        %v1659 = vsel %vm828, %v1646, 0
        %1661 = vmatprep.subr.mxu0 0.0
        %1662 = vmatpush1.msra.mxu0 %v1647
        %1663 = vmatprep.subr.mxu0 0.0
        %1664 = vmatpush1.msra.mxu0 %v1648
        %1665 = vmatprep.subr.mxu0 0.0
        %1666 = vmatpush1.msra.mxu0 %v1649
        %1667 = vmatprep.subr.mxu0 0.0
        %1668 = vmatpush1.msra.mxu0 %v1650
        %1669 = vmatprep.subr.mxu0 0.0
        %1670 = vmatpush1.msra.mxu0 0.0
        %1671 = vmatprep.subr.mxu0 0.0
        %1672 = vmatpush1.msra.mxu0 0.0
        %1673 = vmatprep.subr.mxu0 0.0
        %1674 = vmatpush1.msra.mxu0 0.0
        %1675 = vmatprep.subr.mxu0 0.0
        %1676 = vmatpush1.msra.mxu0 0.0
        %1677 = vmatprep.subr.mxu0 0.0
        %1678 = vmatpush1.msra.mxu0 0.0
        %1679 = vmatprep.subr.mxu0 0.0
        %1680 = vmatpush1.msra.mxu0 0.0
        %1681 = vmatprep.subr.mxu0 0.0
        %1682 = vmatpush1.msra.mxu0 0.0
        %1683 = vmatprep.subr.mxu0 0.0
        %1684 = vmatpush1.msra.mxu0 0.0
        %1685 = vmatprep.subr.mxu0 0.0
        %1686 = vmatpush1.msra.mxu0 0.0
        %1687 = vmatprep.subr.mxu0 0.0
        %1688 = vmatpush1.msra.mxu0 0.0
        %1689 = vmatprep.subr.mxu0 0.0
        %1690 = vmatpush1.msra.mxu0 0.0
        %1691 = vmatprep.subr.mxu0 0.0
        %1692 = vmatpush1.msra.mxu0 0.0
        %1693 = vmatprep.subr.mxu0 0.0
        %1694 = vmatpush1.msra.mxu0 0.0
        %1695 = vmatprep.subr.mxu0 0.0
        %1696 = vmatpush1.msra.mxu0 0.0
        %1697 = vmatprep.subr.mxu0 0.0
        %1698 = vmatpush1.msra.mxu0 0.0
        %1699 = vmatprep.subr.mxu0 0.0
        %1700 = vmatpush1.msra.mxu0 0.0
        %1701 = vmatprep.subr.mxu0 0.0
        %1702 = vmatpush1.msra.mxu0 0.0
        %1703 = vmatprep.subr.mxu0 0.0
        %1704 = vmatpush1.msra.mxu0 0.0
        %1705 = vmatprep.subr.mxu0 0.0
        %1706 = vmatpush1.msra.mxu0 0.0
        %1707 = vmatprep.subr.mxu0 0.0
        %1708 = vmatpush1.msra.mxu0 0.0
        %1709 = vmatprep.subr.mxu0 0.0
        %1710 = vmatpush1.msra.mxu0 0.0
        %1711 = vmatprep.subr.mxu0 0.0
        %1712 = vmatpush1.msra.mxu0 0.0
        %1713 = vmatprep.subr.mxu0 0.0
        %1714 = vmatpush1.msra.mxu0 0.0
        %1715 = vmatprep.subr.mxu0 0.0
        %1716 = vmatpush1.msra.mxu0 0.0
        %1717 = vmatprep.subr.mxu0 0.0
        %1718 = vmatpush1.msra.mxu0 0.0
        %1719 = vmatprep.subr.mxu0 0.0
        %1720 = vmatpush1.msra.mxu0 0.0
        %1721 = vmatprep.subr.mxu0 0.0
        %1722 = vmatpush1.msra.mxu0 0.0
        %1723 = vmatprep.subr.mxu0 0.0
        %1724 = vmatpush1.msra.mxu0 0.0
        %1725 = vmatprep.mubr.f32.mxu0 0.0
        %1726 = vmatmul.mubr.f32.gmra.mrb[0].mxu0 %v1659
        %v1727 = vpop.f32.mrb[0].mxu0
        %v1728 = vadd.f32 %v1656, %v1727
        %v1729 = vpop.f32.mrb[0].mxu0
        %1730 = vdwg.mxu0
        %v1731 = vadd.f32 %v824, %v1728
        %v1732 = vld [vmem:[%s796] sm:$0x1]
        %v1733 = vld [vmem:[%s799] sm:$0x1]
        %v1734 = vsel %vm828, %v1731, 0.0
        %1735 = vadd.xlane.f32.xlu0 %v1734
        %v1736 = vpop.xlane.xlu0 %1735
        %v1737 = vmul.f32 %v1736, %v832
        %v1738 = vsub.f32 %v1731, %v1737
        %v1739 = vmul.f32 %v1738, %v1738
        %v1740 = vsel %vm828, %v1739, 0.0
        %1741 = vadd.xlane.f32.xlu0 %v1740
        %v1742 = vpop.xlane.xlu0 %1741
        %v1743 = vmul.f32 %v1742, 0.032258064
        %v1744 = vrsqrt.pop %v1743
        %v1745 = vmul.f32 %v1743, %v1744
        %vm1746 = vcmp.eq.f32.partialorder %v1743, inf
        %v1747 = vsel %vm1746, %v1743, %v1745
        %vm1748 = vcmp.eq.f32.partialorder %v1743, 0.0
        %v1749 = vand.u32 %v1743, 2147483648
        %v1750 = vsel %vm1748, %v1749, %v1747
        %v1751 = vadd.f32 %v1750, 1e-06
        %v1752 = vrcp.pop %v1751
        %v1753 = vmul.f32 %v1738, %v1752
        %v1755 = vlaneseq
        %v1756 = vshrl.u32 %v1755, 7
        %v1757 = vsub.s32 0, %v1756
        %v1758 = vrot.slane %v1732, %v1757
        %v1760 = vmul.f32 %v1758, %v1753
        %v1762 = vlaneseq
        %v1763 = vshrl.u32 %v1762, 7
        %v1764 = vsub.s32 0, %v1763
        %v1765 = vrot.slane %v1733, %v1764
        %v1767 = vadd.f32 %v1760, %v1765
        %v1768 = vld [vmem:[%s804] sm:$0xff]
        %v1769 = vld [vmem:[%s804 + $0x8] sm:$0xff]
        %v1770 = vld [vmem:[%s804 + $0x10] sm:$0xff]
        %v1771 = vld [vmem:[%s804 + $0x18] sm:$0xff]
        %v1772 = vld [vmem:[%s807] sm:$0x1]
        %v1774 = vlaneseq
        %v1775 = vshrl.u32 %v1774, 7
        %v1776 = vsub.s32 0, %v1775
        %v1777 = vrot.slane %v1772, %v1776
        %v1780 = vsel %vm828, %v1767, 0
        %1782 = vmatprep.subr.mxu0 0.0
        %1783 = vmatpush1.msra.mxu0 %v1768
        %1784 = vmatprep.subr.mxu0 0.0
        %1785 = vmatpush1.msra.mxu0 %v1769
        %1786 = vmatprep.subr.mxu0 0.0
        %1787 = vmatpush1.msra.mxu0 %v1770
        %1788 = vmatprep.subr.mxu0 0.0
        %1789 = vmatpush1.msra.mxu0 %v1771
        %1790 = vmatprep.subr.mxu0 0.0
        %1791 = vmatpush1.msra.mxu0 0.0
        %1792 = vmatprep.subr.mxu0 0.0
        %1793 = vmatpush1.msra.mxu0 0.0
        %1794 = vmatprep.subr.mxu0 0.0
        %1795 = vmatpush1.msra.mxu0 0.0
        %1796 = vmatprep.subr.mxu0 0.0
        %1797 = vmatpush1.msra.mxu0 0.0
        %1798 = vmatprep.subr.mxu0 0.0
        %1799 = vmatpush1.msra.mxu0 0.0
        %1800 = vmatprep.subr.mxu0 0.0
        %1801 = vmatpush1.msra.mxu0 0.0
        %1802 = vmatprep.subr.mxu0 0.0
        %1803 = vmatpush1.msra.mxu0 0.0
        %1804 = vmatprep.subr.mxu0 0.0
        %1805 = vmatpush1.msra.mxu0 0.0
        %1806 = vmatprep.subr.mxu0 0.0
        %1807 = vmatpush1.msra.mxu0 0.0
        %1808 = vmatprep.subr.mxu0 0.0
        %1809 = vmatpush1.msra.mxu0 0.0
        %1810 = vmatprep.subr.mxu0 0.0
        %1811 = vmatpush1.msra.mxu0 0.0
        %1812 = vmatprep.subr.mxu0 0.0
        %1813 = vmatpush1.msra.mxu0 0.0
        %1814 = vmatprep.subr.mxu0 0.0
        %1815 = vmatpush1.msra.mxu0 0.0
        %1816 = vmatprep.subr.mxu0 0.0
        %1817 = vmatpush1.msra.mxu0 0.0
        %1818 = vmatprep.subr.mxu0 0.0
        %1819 = vmatpush1.msra.mxu0 0.0
        %1820 = vmatprep.subr.mxu0 0.0
        %1821 = vmatpush1.msra.mxu0 0.0
        %1822 = vmatprep.subr.mxu0 0.0
        %1823 = vmatpush1.msra.mxu0 0.0
        %1824 = vmatprep.subr.mxu0 0.0
        %1825 = vmatpush1.msra.mxu0 0.0
        %1826 = vmatprep.subr.mxu0 0.0
        %1827 = vmatpush1.msra.mxu0 0.0
        %1828 = vmatprep.subr.mxu0 0.0
        %1829 = vmatpush1.msra.mxu0 0.0
        %1830 = vmatprep.subr.mxu0 0.0
        %1831 = vmatpush1.msra.mxu0 0.0
        %1832 = vmatprep.subr.mxu0 0.0
        %1833 = vmatpush1.msra.mxu0 0.0
        %1834 = vmatprep.subr.mxu0 0.0
        %1835 = vmatpush1.msra.mxu0 0.0
        %1836 = vmatprep.subr.mxu0 0.0
        %1837 = vmatpush1.msra.mxu0 0.0
        %1838 = vmatprep.subr.mxu0 0.0
        %1839 = vmatpush1.msra.mxu0 0.0
        %1840 = vmatprep.subr.mxu0 0.0
        %1841 = vmatpush1.msra.mxu0 0.0
        %1842 = vmatprep.subr.mxu0 0.0
        %1843 = vmatpush1.msra.mxu0 0.0
        %1844 = vmatprep.subr.mxu0 0.0
        %1845 = vmatpush1.msra.mxu0 0.0
        %1846 = vmatprep.mubr.f32.mxu0 0.0
        %1847 = vmatmul.mubr.f32.gmra.mrb[0].mxu0 %v1780
        %v1848 = vpop.f32.mrb[0].mxu0
        %v1849 = vadd.f32 %v1777, %v1848
        %v1850 = vpop.f32.mrb[0].mxu0
        %1851 = vdwg.mxu0
        %v1852 = vmax.f32 %v1849, 0.0
        %v1853 = vld [vmem:[%s812] sm:$0xff]
        %v1854 = vld [vmem:[%s812 + $0x8] sm:$0xff]
        %v1855 = vld [vmem:[%s812 + $0x10] sm:$0xff]
        %v1856 = vld [vmem:[%s812 + $0x18] sm:$0xff]
        %v1857 = vld [vmem:[%s812 + $0x20] sm:$0xff]
        %v1858 = vld [vmem:[%s812 + $0x28] sm:$0xff]
        %v1859 = vld [vmem:[%s812 + $0x30] sm:$0xff]
        %v1860 = vld [vmem:[%s812 + $0x38] sm:$0xff]
        %v1861 = vld [vmem:[%s815] sm:$0x1]
        %v1863 = vlaneseq
        %v1864 = vshrl.u32 %v1863, 7
        %v1865 = vsub.s32 0, %v1864
        %v1866 = vrot.slane %v1861, %v1865
        %vm1868 = vcmask 523264
        %v1870 = vsel %vm1868, %v1852, 0
        %1872 = vmatprep.subr.mxu0 0.0
        %1873 = vmatpush1.msra.mxu0 %v1853
        %1874 = vmatprep.subr.mxu0 0.0
        %1875 = vmatpush1.msra.mxu0 %v1854
        %1876 = vmatprep.subr.mxu0 0.0
        %1877 = vmatpush1.msra.mxu0 %v1855
        %1878 = vmatprep.subr.mxu0 0.0
        %1879 = vmatpush1.msra.mxu0 %v1856
        %1880 = vmatprep.subr.mxu0 0.0
        %1881 = vmatpush1.msra.mxu0 %v1857
        %1882 = vmatprep.subr.mxu0 0.0
        %1883 = vmatpush1.msra.mxu0 %v1858
        %1884 = vmatprep.subr.mxu0 0.0
        %1885 = vmatpush1.msra.mxu0 %v1859
        %1886 = vmatprep.subr.mxu0 0.0
        %1887 = vmatpush1.msra.mxu0 %v1860
        %1888 = vmatprep.subr.mxu0 0.0
        %1889 = vmatpush1.msra.mxu0 0.0
        %1890 = vmatprep.subr.mxu0 0.0
        %1891 = vmatpush1.msra.mxu0 0.0
        %1892 = vmatprep.subr.mxu0 0.0
        %1893 = vmatpush1.msra.mxu0 0.0
        %1894 = vmatprep.subr.mxu0 0.0
        %1895 = vmatpush1.msra.mxu0 0.0
        %1896 = vmatprep.subr.mxu0 0.0
        %1897 = vmatpush1.msra.mxu0 0.0
        %1898 = vmatprep.subr.mxu0 0.0
        %1899 = vmatpush1.msra.mxu0 0.0
        %1900 = vmatprep.subr.mxu0 0.0
        %1901 = vmatpush1.msra.mxu0 0.0
        %1902 = vmatprep.subr.mxu0 0.0
        %1903 = vmatpush1.msra.mxu0 0.0
        %1904 = vmatprep.subr.mxu0 0.0
        %1905 = vmatpush1.msra.mxu0 0.0
        %1906 = vmatprep.subr.mxu0 0.0
        %1907 = vmatpush1.msra.mxu0 0.0
        %1908 = vmatprep.subr.mxu0 0.0
        %1909 = vmatpush1.msra.mxu0 0.0
        %1910 = vmatprep.subr.mxu0 0.0
        %1911 = vmatpush1.msra.mxu0 0.0
        %1912 = vmatprep.subr.mxu0 0.0
        %1913 = vmatpush1.msra.mxu0 0.0
        %1914 = vmatprep.subr.mxu0 0.0
        %1915 = vmatpush1.msra.mxu0 0.0
        %1916 = vmatprep.subr.mxu0 0.0
        %1917 = vmatpush1.msra.mxu0 0.0
        %1918 = vmatprep.subr.mxu0 0.0
        %1919 = vmatpush1.msra.mxu0 0.0
        %1920 = vmatprep.subr.mxu0 0.0
        %1921 = vmatpush1.msra.mxu0 0.0
        %1922 = vmatprep.subr.mxu0 0.0
        %1923 = vmatpush1.msra.mxu0 0.0
        %1924 = vmatprep.subr.mxu0 0.0
        %1925 = vmatpush1.msra.mxu0 0.0
        %1926 = vmatprep.subr.mxu0 0.0
        %1927 = vmatpush1.msra.mxu0 0.0
        %1928 = vmatprep.subr.mxu0 0.0
        %1929 = vmatpush1.msra.mxu0 0.0
        %1930 = vmatprep.subr.mxu0 0.0
        %1931 = vmatpush1.msra.mxu0 0.0
        %1932 = vmatprep.subr.mxu0 0.0
        %1933 = vmatpush1.msra.mxu0 0.0
        %1934 = vmatprep.subr.mxu0 0.0
        %1935 = vmatpush1.msra.mxu0 0.0
        %1936 = vmatprep.mubr.f32.mxu0 0.0
        %1937 = vmatmul.mubr.f32.gmra.mrb[0].mxu0 %v1870
        %v1938 = vpop.f32.mrb[0].mxu0
        %v1939 = vadd.f32 %v1866, %v1938
        %v1940 = vpop.f32.mrb[0].mxu0
        %1941 = vdwg.mxu0
        %v1942 = vadd.f32 %v1731, %v1939
        %1943 = vst.msk [vmem:[#allocation2] sm:$0xff] %vm828, %v1942
        // Predicated region
        $region113: #{tpu_custom_call.1} parent=83 // pred_check
          %p1944 = pneg %p816
        $region114: #{tpu_custom_call.1} parent=83 // pred_check_branch
          %1946 = sbr.rel (%p1944) target = $region116
        $region115: #{tpu_custom_call.1} parent=83 // pred_region
          %v1947 = vld [vmem:[%s14] sm:$0x1]
          %v1948 = vld [vmem:[%s15] sm:$0x1]
          %v1949 = vsel %vm828, %v1942, 0.0
          %1950 = vadd.xlane.f32.xlu0 %v1949
          %v1951 = vpop.xlane.xlu0 %1950
          %v1952 = vmul.f32 %v1951, %v832
          %v1953 = vsub.f32 %v1942, %v1952
          %v1954 = vmul.f32 %v1953, %v1953
          %v1955 = vsel %vm828, %v1954, 0.0
          %1956 = vadd.xlane.f32.xlu0 %v1955
          %v1957 = vpop.xlane.xlu0 %1956
          %v1958 = vmul.f32 %v1957, 0.032258064
          %v1959 = vrsqrt.pop %v1958
          %v1960 = vmul.f32 %v1958, %v1959
          %vm1961 = vcmp.eq.f32.partialorder %v1958, inf
          %v1962 = vsel %vm1961, %v1958, %v1960
          %vm1963 = vcmp.eq.f32.partialorder %v1958, 0.0
          %v1964 = vand.u32 %v1958, 2147483648
          %v1965 = vsel %vm1963, %v1964, %v1962
          %v1966 = vadd.f32 %v1965, 1e-06
          %v1967 = vrcp.pop %v1966
          %v1968 = vmul.f32 %v1953, %v1967
          %v1970 = vlaneseq
          %v1971 = vshrl.u32 %v1970, 7
          %v1972 = vsub.s32 0, %v1971
          %v1973 = vrot.slane %v1947, %v1972
          %v1975 = vmul.f32 %v1973, %v1968
          %v1977 = vlaneseq
          %v1978 = vshrl.u32 %v1977, 7
          %v1979 = vsub.s32 0, %v1978
          %v1980 = vrot.slane %v1948, %v1979
          %v1982 = vadd.f32 %v1975, %v1980
          %1983 = vst.msk [vmem:[%s764] sm:$0xff] %vm828, %v1982
        $region116: #{tpu_custom_call.1} parent=83 // pred_fallthru
          _
        %s1984 = sand.u32 %s467, 1
        %s1985 = scalar_lea.sflag [#allocation6], %s1984
        %s1986 = sand.u32 %s467, 1
        %s1987 = smul.addr %s1986, 8
        %s1988 = scalar_lea.vmem [#allocation9], %s1987
        %s1989 = sand.u32 %s493, 1
        %s1990 = scalar_lea.sflag [#allocation11], %s1989
        %s1991 = sand.u32 %s493, 1
        %s1992 = smul.addr %s1991, 32
        %s1993 = scalar_lea.vmem [#allocation10], %s1992
        // Predicated region
        $region117: #{tpu_custom_call.1} parent=83 // pred_check
          %p1994 = pneg %p477
        $region118: #{tpu_custom_call.1} parent=83 // pred_check_branch
          %1996 = sbr.rel (%p1994) target = $region120
        $region119: #{tpu_custom_call.1} parent=83 // pred_region
          %s1998 = ssub.s32 128, 128
          %1999 = vsyncadd %s1985, %s1998
          %s2000 = smul.addr %s45, 128
          %s2001 = scalar_lea.hbm %s16, %s2000
          %s2003 = sshll.u32 %s1988, 4
          %s2004 = int_to_ptr.vmem [resolvable:$true] %s2003
          %2006 = dma.vmem_to_hbm [thread:$0]  %s2004, 128, %s2001, %s1985
        $region120: #{tpu_custom_call.1} parent=83 // pred_fallthru
          _
        // Predicated region
        $region121: #{tpu_custom_call.1} parent=83 // pred_check
          %p2007 = pneg %p503
        $region122: #{tpu_custom_call.1} parent=83 // pred_check_branch
          %2009 = sbr.rel (%p2007) target = $region124
        $region123: #{tpu_custom_call.1} parent=83 // pred_region
          %s2011 = ssub.s32 512, 512
          %2012 = vsyncadd %s1990, %s2011
          %s2013 = smul.addr %s45, 4
          %s2014 = smul.addr %s2013, 128
          %s2015 = scalar_lea.hbm %s17, %s2014
          %s2016 = sshll.u32 %s1993, 4
          %s2017 = int_to_ptr.vmem [resolvable:$true] %s2016
          %2022 = dma.vmem_to_hbm [thread:$0]  %s2017, 512, %s2015, %s1990, 128, 128, 8
        $region124: #{tpu_custom_call.1} parent=83 // pred_fallthru
          _
      $region84: #{tpu_custom_call.1} parent=5 // pred_fallthru
        _
      %p2023 = scmp.le.s32.totalorder 2, %s36
      // Predicated region
      $region125: #{tpu_custom_call.1} parent=5 // pred_check
        %p2024 = pneg %p2023
      $region126: #{tpu_custom_call.1} parent=5 // pred_check_branch
        %2026 = sbr.rel (%p2024) target = $region128
      $region127: #{tpu_custom_call.1} parent=5 // pred_region
        %s2027 = ssub.s32 %s36, 2
        // Predicated region
        $region129: #{tpu_custom_call.1} parent=127 // pred_check
          %p2028 = pneg %p483
        $region130: #{tpu_custom_call.1} parent=127 // pred_check_branch
          %2030 = sbr.rel (%p2028) target = $region132
        $region131: #{tpu_custom_call.1} parent=127 // pred_region
          %s2031 = sand.u32 %s468, 1
          %s2032 = scalar_lea.sflag [#allocation6], %s2031
          %s2033 = sand.u32 %s468, 1
          %s2034 = smul.addr %s2033, 8
          %s2035 = scalar_lea.vmem [#allocation9], %s2034
          %2036 = dma.done %s2032, 128
        $region132: #{tpu_custom_call.1} parent=127 // pred_fallthru
          _
        // Predicated region
        $region133: #{tpu_custom_call.1} parent=127 // pred_check
          %p2037 = pneg %p509
        $region134: #{tpu_custom_call.1} parent=127 // pred_check_branch
          %2039 = sbr.rel (%p2037) target = $region136
        $region135: #{tpu_custom_call.1} parent=127 // pred_region
          %s2040 = sand.u32 %s494, 1
          %s2041 = scalar_lea.sflag [#allocation11], %s2040
          %s2042 = sand.u32 %s494, 1
          %s2043 = smul.addr %s2042, 32
          %s2044 = scalar_lea.vmem [#allocation10], %s2043
          %2045 = dma.done %s2041, 512
        $region136: #{tpu_custom_call.1} parent=127 // pred_fallthru
          _
      $region128: #{tpu_custom_call.1} parent=5 // pred_fallthru
        _
    $region6: #{tpu_custom_call.1} parent=1 // loop_footer
      %s40 = sadd.s32 1, %s36
    $region7: #{tpu_custom_call.1} parent=1 // loop_footer_branch
      %35 = sbr.rel target = $region3
    $region8: #{tpu_custom_call.1} parent=1 // loop_exit
      _
    %2046 = vsyncpa [#allocation5], 1
    %s2047 = scalar_lea.sflag [#allocation5], 1
    %2048 = vsyncpa %s2047, 1
    %2049 = vsyncpa [#allocation8], 1
    %s2050 = scalar_lea.sflag [#allocation8], 1
    %2051 = vsyncpa %s2050, 1
    %2052 = vsyncpa [#allocation6], 1
    %s2053 = scalar_lea.sflag [#allocation6], 1
    %2054 = vsyncpa %s2053, 1
    %2055 = vsyncpa [#allocation11], 1
    %s2056 = scalar_lea.sflag [#allocation11], 1
    %2057 = vsyncpa %s2056, 1

</llo_original>
